<compile_context>
chip_gen: v5e
topology: v5e:2x2
jax: 0.10.0
libtpu: 0.0.40
codegen_flags: <defaults>
</compile_context>

<pallas_src>
import functools

import jax
import jax.numpy as jnp
from jax.experimental import pallas as pl
from jax.experimental.pallas import tpu as pltpu


_TRANS_B = (((1,), (1,)), ((), ()))   # dot_general dims: contract last of both (A @ B.T)


def _fused_head_kernel(xcol_ref, w1_ref, b1_ref, gmat_ref, gamma_ref, beta_ref,
                       w2c_ref, b2c_ref, w2r_ref, b2r_ref,
                       cls_ref, reg_ref, s1_ref, s2_ref,
                       *, group_size, spatial, eps):
    """One (batch, pass, spatial-tile) grid step of the fused detector head.

    xcol_ref : (1, TP, K1)  bf16 im2col patches (K1 = 27*Cin), TP = spatial tile
    w1_ref   : (K1, C)      bf16 fused 3x3x3 conv weight (C = 2*out_channels)
    b1/gamma/beta : (1, C)  f32
    gmat_ref : (C, C)       f32 GroupNorm group-membership matrix
    w2c_ref  : (Ncls, C)    f32 class 1x1 conv weight (zero on regression channels)
    b2c_ref  : (Ncls, 1)
    w2r_ref  : (Nreg, C)    f32 regression 1x1 conv weight (zero on class channels)
    b2r_ref  : (Nreg, 1)
    cls_ref  : (1, Ncls, TP)  lane-dense output (channels x spatial)
    reg_ref  : (1, Nreg, TP)
    s1/s2    : (1, C) f32 VMEM scratch: per-channel sum / sum-of-squares over full P
    """
    p = pl.program_id(1)     # 0 = stats pass, 1 = normalize / compute pass
    t = pl.program_id(2)     # spatial tile index

    @pl.when((p == 0) & (t == 0))
    def _init_stats():
        s1_ref[...] = jnp.zeros_like(s1_ref)
        s2_ref[...] = jnp.zeros_like(s2_ref)

    # conv3x3x3 as matmul on im2col (bf16 inputs, f32 accumulation) + bias
    h = jnp.dot(xcol_ref[0], w1_ref[...],
                preferred_element_type=jnp.float32) + b1_ref[...]        # (TP, C) f32

    @pl.when(p == 0)
    def _accumulate_stats():
        s1_ref[...] += jnp.sum(h, axis=0, keepdims=True)
        s2_ref[...] += jnp.sum(h * h, axis=0, keepdims=True)

    @pl.when(p == 1)
    def _compute():
        # --- GroupNorm (stats cover the FULL spatial extent; biased variance) ---
        inv_denom = 1.0 / float(spatial * group_size)
        g1 = jnp.dot(s1_ref[...], gmat_ref[...], preferred_element_type=jnp.float32)
        g2 = jnp.dot(s2_ref[...], gmat_ref[...], preferred_element_type=jnp.float32)
        mean = g1 * inv_denom
        var = g2 * inv_denom - mean * mean
        scale = jax.lax.rsqrt(var + eps) * gamma_ref[...]
        shift = beta_ref[...] - mean * scale
        hr = jnp.maximum(h * scale + shift, 0.0)                         # GN + ReLU

        # --- class head: 1x1x1 conv computed transposed (lane-dense) + sigmoid_hm ---
        yc = jax.lax.dot_general(w2c_ref[...], hr, _TRANS_B,
                                 preferred_element_type=jnp.float32) + b2c_ref[...]
        cls = jnp.clip(jax.nn.sigmoid(yc), 0.0001, 1.0 - 0.0001)
        cls_ref[0] = cls.astype(cls_ref.dtype)

        # --- regression head: 1x1x1 conv + (tanh | sigmoid-0.5 | L2-normalize) ---
        yr = jax.lax.dot_general(w2r_ref[...], hr, _TRANS_B,
                                 preferred_element_type=jnp.float32) + b2r_ref[...]
        row = jax.lax.broadcasted_iota(jnp.int32, yr.shape, 0)
        tanh_part = jnp.tanh(yr)
        size_part = jax.nn.sigmoid(yr) - 0.5
        ssq = jnp.sum(jnp.where(row >= 6, yr * yr, 0.0), axis=0, keepdims=True)
        # F.normalize: x / max(||x||, 1e-12) == x * rsqrt(max(||x||^2, 1e-24))
        ang_part = yr * jax.lax.rsqrt(jnp.maximum(ssq, 1e-24))
        reg = jnp.where(row < 3, tanh_part,
                        jnp.where(row < 6, size_part, ang_part))
        reg_ref[0] = reg.astype(reg_ref.dtype)


def _pick_spatial_tile(P, K1, max_tile_bytes=8 << 20):
    """Largest 128-multiple tile dividing P with a bounded double-buffered bf16 block."""
    candidates = [tp for tp in (2048, 1024, 512, 256, 128) if P % tp == 0]
    for tp in candidates:
        if 2 * tp * K1 * 2 <= max_tile_bytes:
            return tp
    if candidates:
        return candidates[-1]
    return P      # tiny / irregular P: single full-extent block


def _run_fused(xcol, fused, *, num_groups, tile_p):
    N, P, K1 = xcol.shape
    C = fused["w1"].shape[1]                   # fused channel count = 2 * out_channels
    ncls = fused["w2c"].shape[0]
    nreg = fused["w2r"].shape[0]
    group_size = C // (2 * num_groups)         # channels per GroupNorm group
    n_tiles = P // tile_p

    kernel = functools.partial(_fused_head_kernel, group_size=group_size,
                               spatial=P, eps=1e-5)

    # rough VMEM budget (double-buffered blocks) -> explicit limit with headroom
    est = (2 * tile_p * K1 * 2                       # xcol tile (bf16), double buffered
           + 2 * (ncls + nreg) * tile_p * 4          # output tiles, double buffered
           + 2 * (K1 * C * 2 + C * C * 4 + 3 * C * 4
                  + (ncls + nreg) * (C + 1) * 4)     # weights / params
           + 2 * C * 4)                              # stats scratch
    vmem_limit = min(int(est * 2 + (8 << 20)), 96 << 20)

    return pl.pallas_call(
        kernel,
        out_shape=(jax.ShapeDtypeStruct((N, ncls, P), jnp.float32),
                   jax.ShapeDtypeStruct((N, nreg, P), jnp.float32)),
        grid=(N, 2, n_tiles),
        in_specs=[
            pl.BlockSpec((1, tile_p, K1), lambda n, p, t: (n, t, 0)),
            pl.BlockSpec((K1, C), lambda n, p, t: (0, 0)),
            pl.BlockSpec((1, C), lambda n, p, t: (0, 0)),
            pl.BlockSpec((C, C), lambda n, p, t: (0, 0)),
            pl.BlockSpec((1, C), lambda n, p, t: (0, 0)),
            pl.BlockSpec((1, C), lambda n, p, t: (0, 0)),
            pl.BlockSpec((ncls, C), lambda n, p, t: (0, 0)),
            pl.BlockSpec((ncls, 1), lambda n, p, t: (0, 0)),
            pl.BlockSpec((nreg, C), lambda n, p, t: (0, 0)),
            pl.BlockSpec((nreg, 1), lambda n, p, t: (0, 0)),
        ],
        out_specs=(
            pl.BlockSpec((1, ncls, tile_p), lambda n, p, t: (n, 0, t)),
            pl.BlockSpec((1, nreg, tile_p), lambda n, p, t: (n, 0, t)),
        ),
        scratch_shapes=[pltpu.VMEM((1, C), jnp.float32),
                        pltpu.VMEM((1, C), jnp.float32)],
        compiler_params=pltpu.CompilerParams(
            # batch axis parallel (megacore); pass + spatial/stat axes must stay serial.
            # TODO(synk): for v7x with N==1, shard the spatial axis across the two
            # TensorCores via per-core partial stats + a cross-core reduce.
            dimension_semantics=("parallel", "arbitrary", "arbitrary"),
            vmem_limit_bytes=vmem_limit),
    )(xcol, fused["w1"], fused["b1"], fused["gmat"], fused["gamma"], fused["beta"],
      fused["w2c"], fused["b2c"], fused["w2r"], fused["b2r"])


def _im2col_3x3x3(features_ncdhw):
    """NCDHW -> (N, D*H*W, 27*Cin) patches of a padded 3x3x3 conv (XLA glue)."""
    N, Cin, D, H, W = features_ncdhw.shape
    x = jnp.transpose(features_ncdhw, (0, 2, 3, 4, 1))           # NDHWC
    xp = jnp.pad(x, ((0, 0), (1, 1), (1, 1), (1, 1), (0, 0)))
    patches = []
    for dz in range(3):
        for dy in range(3):
            for dx in range(3):
                patches.append(xp[:, dz:dz + D, dy:dy + H, dx:dx + W, :])
    xcol = jnp.stack(patches, axis=4)                            # (N,D,H,W,27,Cin)
    return xcol.reshape(N, D * H * W, 27 * Cin)


def _fuse_params(params):
    """Concatenate / zero-pad the two heads' params into the fused-kernel layout."""
    cout = params["cls_w1"].shape[1]
    ncls = params["cls_w2"].shape[1]
    nreg = params["reg_w2"].shape[1]
    cg = cout // params["num_groups"]
    C = 2 * cout

    w1 = jnp.concatenate([params["cls_w1"], params["reg_w1"]], axis=1).astype(jnp.bfloat16)
    b1 = jnp.concatenate([params["cls_b1"], params["reg_b1"]], axis=1)
    gamma = jnp.concatenate([params["cls_gamma"], params["reg_gamma"]], axis=1)
    beta = jnp.concatenate([params["cls_beta"], params["reg_beta"]], axis=1)
    grp = jnp.arange(C) // cg
    gmat = (grp[:, None] == grp[None, :]).astype(jnp.float32)

    w2c = jnp.concatenate([params["cls_w2"].T, jnp.zeros((ncls, cout), jnp.float32)], axis=1)
    w2r = jnp.concatenate([jnp.zeros((nreg, cout), jnp.float32), params["reg_w2"].T], axis=1)
    b2c = params["cls_b2"].T
    b2r = params["reg_b2"].T
    return dict(w1=w1, b1=b1, gamma=gamma, beta=beta, gmat=gmat,
                w2c=w2c, b2c=b2c, w2r=w2r, b2r=b2r)


def detector_forward(features_ncdhw, params):
    """Forward pass matching Detector.forward. Input/output are NCDHW like PyTorch."""
    N, Cin, D, H, W = features_ncdhw.shape
    P = D * H * W
    K1 = 27 * Cin
    xcol = _im2col_3x3x3(features_ncdhw).astype(jnp.bfloat16)   # halve dominant HBM reads
    fused = _fuse_params(params)
    tile_p = _pick_spatial_tile(P, K1)
    cls, reg = _run_fused(xcol, fused, num_groups=params["num_groups"], tile_p=tile_p)
    # outputs are already channel-major (N, C, P): reshape only, no transpose needed
    return (cls.reshape(N, cls.shape[1], D, H, W),
            reg.reshape(N, reg.shape[1], D, H, W))


def _ref_head(xcol, w1, b1, gamma, beta, w2, b2, *, mode, num_groups):
    """Pure-JAX reference with the same bf16 input quantization as the kernel."""
    h = jnp.einsum("npk,kc->npc", xcol.astype(jnp.bfloat16), w1.astype(jnp.bfloat16),
                   preferred_element_type=jnp.float32) + b1
    N, P, Cout = h.shape
    cg = Cout // num_groups
    hg = h.reshape(N, P, num_groups, cg)
    mean = hg.mean(axis=(1, 3), keepdims=True)
    var = ((hg - mean) ** 2).mean(axis=(1, 3), keepdims=True)
    hn = ((hg - mean) / jnp.sqrt(var + 1e-5)).reshape(N, P, Cout) * gamma + beta
    hr = jnp.maximum(hn, 0.0)
    y = jnp.einsum("npc,cd->npd", hr, w2) + b2
    if mode == "class":
        return jnp.clip(jax.nn.sigmoid(y), 0.0001, 1.0 - 0.0001)
    off = jnp.tanh(y[..., :3])
    size = jax.nn.sigmoid(y[..., 3:6]) - 0.5
    ang = y[..., 6:]
    norm = jnp.sqrt(jnp.sum(ang * ang, axis=-1, keepdims=True))
    ang = ang / jnp.maximum(norm, 1e-12)
    return jnp.concatenate([off, size, ang], axis=-1)


def make_params(key, in_channels, out_channels, num_classes, num_regression):
    num_groups = 32 if out_channels % 32 == 0 else 16
    assert out_channels % num_groups == 0
    keys = jax.random.split(key, 6)

    def conv3_w(k, cout, cin):
        w = 0.1 * jax.random.normal(k, (cout, cin, 3, 3, 3), jnp.float32)
        # (cout, cin, kz, ky, kx) -> (kz, ky, kx, cin, cout) -> (27*cin, cout)
        return jnp.transpose(w, (2, 3, 4, 1, 0)).reshape(27 * cin, cout)

    def conv1_w(k, cout, cin):
        w = 0.1 * jax.random.normal(k, (cout, cin), jnp.float32)
        return jnp.transpose(w, (1, 0))  # (cin, cout)

    return dict(
        num_groups=num_groups,
        # class head
        cls_w1=conv3_w(keys[0], out_channels, in_channels),
        cls_b1=0.05 * jax.random.normal(keys[1], (1, out_channels), jnp.float32),
        cls_gamma=jnp.ones((1, out_channels), jnp.float32),
        cls_beta=jnp.zeros((1, out_channels), jnp.float32),
        cls_w2=conv1_w(keys[2], num_classes, out_channels),
        cls_b2=jnp.full((1, num_classes), -2.19, jnp.float32),   # bias.data.fill_(-2.19)
        # regression head (fill_fc_weights -> conv biases = 0)
        reg_w1=conv3_w(keys[3], out_channels, in_channels),
        reg_b1=jnp.zeros((1, out_channels), jnp.float32),
        reg_gamma=jnp.ones((1, out_channels), jnp.float32),
        reg_beta=jnp.zeros((1, out_channels), jnp.float32),
        reg_w2=conv1_w(keys[4], num_regression, out_channels),
        reg_b2=jnp.zeros((1, num_regression), jnp.float32),
    )


if __name__ == "__main__":
    key = jax.random.PRNGKey(0)
    kf, kp = jax.random.split(key)

    in_channels, out_channels = 8, 48          # 48 % 32 != 0 -> GroupNorm(16, 48)
    num_classes, num_regression = 3, 8         # 3 offset + 3 size + 2 angle channels
    N, D, H, W = 2, 4, 8, 8                    # P = 256 spatial positions

    features = jax.random.normal(kf, (N, in_channels, D, H, W), jnp.float32)
    params = make_params(kp, in_channels, out_channels, num_classes, num_regression)

    head_class, head_regression = detector_forward(features, params)
    jax.block_until_ready(head_class)
    jax.block_until_ready(head_regression)

    assert head_class.shape == (N, num_classes, D, H, W)
    assert head_regression.shape == (N, num_regression, D, H, W)

    # correctness check vs a pure-JAX reference using the same bf16 input quantization
    xcol = _im2col_3x3x3(features)
    ref_cls = _ref_head(xcol, params["cls_w1"], params["cls_b1"], params["cls_gamma"],
                        params["cls_beta"], params["cls_w2"], params["cls_b2"],
                        mode="class", num_groups=params["num_groups"])
    ref_reg = _ref_head(xcol, params["reg_w1"], params["reg_b1"], params["reg_gamma"],
                        params["reg_beta"], params["reg_w2"], params["reg_b2"],
                        mode="regression", num_groups=params["num_groups"])

    def to_ncdhw(y):
        return jnp.transpose(y.reshape(N, D, H, W, -1), (0, 4, 1, 2, 3))

    err_c = float(jnp.max(jnp.abs(head_class - to_ncdhw(ref_cls))))
    err_r = float(jnp.max(jnp.abs(head_regression - to_ncdhw(ref_reg))))
    assert err_c < 5e-3 and err_r < 5e-3, (err_c, err_r)

    print("KERNEL_OK")
</pallas_src>

<mosaic_0001>
module attributes {stable_mosaic.version = 11 : i64} {
  func.func @_fused_head_kernel(%arg0: i32, %arg1: i32, %arg2: i32, %arg3: memref<1x256x216xbf16, #tpu.memory_space<vmem>>, %arg4: memref<216x96xbf16, #tpu.memory_space<vmem>>, %arg5: memref<1x96xf32, #tpu.memory_space<vmem>>, %arg6: memref<96x96xf32, #tpu.memory_space<vmem>>, %arg7: memref<1x96xf32, #tpu.memory_space<vmem>>, %arg8: memref<1x96xf32, #tpu.memory_space<vmem>>, %arg9: memref<3x96xf32, #tpu.memory_space<vmem>>, %arg10: memref<3x1xf32, #tpu.memory_space<vmem>>, %arg11: memref<8x96xf32, #tpu.memory_space<vmem>>, %arg12: memref<8x1xf32, #tpu.memory_space<vmem>>, %arg13: memref<1x3x256xf32, #tpu.memory_space<vmem>>, %arg14: memref<1x8x256xf32, #tpu.memory_space<vmem>>, %arg15: memref<1x96xf32, #tpu.memory_space<vmem>>, %arg16: memref<1x96xf32, #tpu.memory_space<vmem>>) attributes {dimension_semantics = [#tpu.dimension_semantics<parallel>, #tpu.dimension_semantics<arbitrary>, #tpu.dimension_semantics<arbitrary>], iteration_bounds = array<i64: 2, 2, 1>, scalar_prefetch = 0 : i64, scratch_operands = 2 : i64, tpu.core_type = #tpu.core_type<tc>, window_params = [{transform_indices = @transform_0, window_bounds = array<i64: 1, 256, 216>}, {pipeline_mode = #tpu.pipeline_mode<synchronous>, transform_indices = @transform_1, window_bounds = array<i64: 216, 96>}, {pipeline_mode = #tpu.pipeline_mode<synchronous>, transform_indices = @transform_2, window_bounds = array<i64: 1, 96>}, {pipeline_mode = #tpu.pipeline_mode<synchronous>, transform_indices = @transform_3, window_bounds = array<i64: 96, 96>}, {pipeline_mode = #tpu.pipeline_mode<synchronous>, transform_indices = @transform_4, window_bounds = array<i64: 1, 96>}, {pipeline_mode = #tpu.pipeline_mode<synchronous>, transform_indices = @transform_5, window_bounds = array<i64: 1, 96>}, {pipeline_mode = #tpu.pipeline_mode<synchronous>, transform_indices = @transform_6, window_bounds = array<i64: 3, 96>}, {pipeline_mode = #tpu.pipeline_mode<synchronous>, transform_indices = @transform_7, window_bounds = array<i64: 3, 1>}, {pipeline_mode = #tpu.pipeline_mode<synchronous>, transform_indices = @transform_8, window_bounds = array<i64: 8, 96>}, {pipeline_mode = #tpu.pipeline_mode<synchronous>, transform_indices = @transform_9, window_bounds = array<i64: 8, 1>}, {transform_indices = @transform_10, window_bounds = array<i64: 1, 3, 256>}, {transform_indices = @transform_11, window_bounds = array<i64: 1, 8, 256>}]} {
    %c0_i32 = arith.constant 0 : i32
    %0 = arith.cmpi eq, %arg1, %c0_i32 : i32
    %c0_i32_0 = arith.constant 0 : i32
    %1 = arith.cmpi eq, %arg2, %c0_i32_0 : i32
    %2 = arith.andi %0, %1 : i1
    %3 = arith.extui %2 : i1 to i32
    %c0_i32_1 = arith.constant 0 : i32
    %4 = arith.cmpi ne, %3, %c0_i32_1 : i32
    scf.if %4 {
      %cst_11 = arith.constant 0.000000e+00 : f32
      %18 = vector.broadcast %cst_11 : f32 to vector<1x96xf32>
      %c0_12 = arith.constant 0 : index
      %c0_13 = arith.constant 0 : index
      %19 = vector.load %arg15[%c0_12, %c0_13] : memref<1x96xf32, #tpu.memory_space<vmem>>, vector<1x96xf32>
      tpu.vector_store %arg15[%c0_12, %c0_13], %18 {strides = array<i32>} : memref<1x96xf32, #tpu.memory_space<vmem>>, vector<1x96xf32>,
      %cst_14 = arith.constant 0.000000e+00 : f32
      %20 = vector.broadcast %cst_14 : f32 to vector<1x96xf32>
      %c0_15 = arith.constant 0 : index
      %c0_16 = arith.constant 0 : index
      %21 = vector.load %arg16[%c0_15, %c0_16] : memref<1x96xf32, #tpu.memory_space<vmem>>, vector<1x96xf32>
      tpu.vector_store %arg16[%c0_15, %c0_16], %20 {strides = array<i32>} : memref<1x96xf32, #tpu.memory_space<vmem>>, vector<1x96xf32>,
    } else {
    }
    %c0 = arith.constant 0 : index
    %c0_2 = arith.constant 0 : index
    %c0_3 = arith.constant 0 : index
    %5 = vector.load %arg3[%c0, %c0_2, %c0_3] : memref<1x256x216xbf16, #tpu.memory_space<vmem>>, vector<1x256x216xbf16>
    %6 = vector.shape_cast %5 : vector<1x256x216xbf16> to vector<256x216xbf16>
    %c0_4 = arith.constant 0 : index
    %c0_5 = arith.constant 0 : index
    %7 = vector.load %arg4[%c0_4, %c0_5] : memref<216x96xbf16, #tpu.memory_space<vmem>>, vector<216x96xbf16>
    %cst = arith.constant dense<0.000000e+00> : vector<256x96xf32>
    %8 = tpu.matmul %6, %7, %cst {dimension_numbers = #tpu.dot_dimension_numbers<[1], [0], [0], [1], [0, 0, 1, 1], [], []>} : vector<256x216xbf16>, vector<216x96xbf16>, vector<256x96xf32> -> vector<256x96xf32>
    %c0_6 = arith.constant 0 : index
    %c0_7 = arith.constant 0 : index
    %9 = vector.load %arg5[%c0_6, %c0_7] : memref<1x96xf32, #tpu.memory_space<vmem>>, vector<1x96xf32>
    %10 = vector.broadcast %9 : vector<1x96xf32> to vector<256x96xf32>
    %11 = arith.addf %8, %10 : vector<256x96xf32>
    %c0_i32_8 = arith.constant 0 : i32
    %12 = arith.cmpi eq, %arg1, %c0_i32_8 : i32
    %13 = arith.extui %12 : i1 to i32
    %c0_i32_9 = arith.constant 0 : i32
    %14 = arith.cmpi ne, %13, %c0_i32_9 : i32
    scf.if %14 {
      %c0_11 = arith.constant 0 : index
      %c0_12 = arith.constant 0 : index
      %18 = vector.load %arg15[%c0_11, %c0_12] : memref<1x96xf32, #tpu.memory_space<vmem>>, vector<1x96xf32>
      %cst_13 = arith.constant dense<0.000000e+00> : vector<96xf32>
      %19 = vector.multi_reduction <add>, %11, %cst_13 [0] : vector<256x96xf32> to vector<96xf32>
      %20 = vector.shape_cast %19 : vector<96xf32> to vector<1x96xf32>
      %21 = arith.addf %18, %20 : vector<1x96xf32>
      %c0_14 = arith.constant 0 : index
      %c0_15 = arith.constant 0 : index
      %22 = vector.load %arg15[%c0_14, %c0_15] : memref<1x96xf32, #tpu.memory_space<vmem>>, vector<1x96xf32>
      tpu.vector_store %arg15[%c0_14, %c0_15], %21 {strides = array<i32>} : memref<1x96xf32, #tpu.memory_space<vmem>>, vector<1x96xf32>,
      %c0_16 = arith.constant 0 : index
      %c0_17 = arith.constant 0 : index
      %23 = vector.load %arg16[%c0_16, %c0_17] : memref<1x96xf32, #tpu.memory_space<vmem>>, vector<1x96xf32>
      %24 = arith.mulf %11, %11 : vector<256x96xf32>
      %cst_18 = arith.constant dense<0.000000e+00> : vector<96xf32>
      %25 = vector.multi_reduction <add>, %24, %cst_18 [0] : vector<256x96xf32> to vector<96xf32>
      %26 = vector.shape_cast %25 : vector<96xf32> to vector<1x96xf32>
      %27 = arith.addf %23, %26 : vector<1x96xf32>
      %c0_19 = arith.constant 0 : index
      %c0_20 = arith.constant 0 : index
      %28 = vector.load %arg16[%c0_19, %c0_20] : memref<1x96xf32, #tpu.memory_space<vmem>>, vector<1x96xf32>
      tpu.vector_store %arg16[%c0_19, %c0_20], %27 {strides = array<i32>} : memref<1x96xf32, #tpu.memory_space<vmem>>, vector<1x96xf32>,
    } else {
    }
    %c1_i32 = arith.constant 1 : i32
    %15 = arith.cmpi eq, %arg1, %c1_i32 : i32
    %16 = arith.extui %15 : i1 to i32
    %c0_i32_10 = arith.constant 0 : i32
    %17 = arith.cmpi ne, %16, %c0_i32_10 : i32
    scf.if %17 {
      %c0_11 = arith.constant 0 : index
      %c0_12 = arith.constant 0 : index
      %18 = vector.load %arg15[%c0_11, %c0_12] : memref<1x96xf32, #tpu.memory_space<vmem>>, vector<1x96xf32>
      %c0_13 = arith.constant 0 : index
      %c0_14 = arith.constant 0 : index
      %19 = vector.load %arg6[%c0_13, %c0_14] : memref<96x96xf32, #tpu.memory_space<vmem>>, vector<96x96xf32>
      %cst_15 = arith.constant dense<0.000000e+00> : vector<1x96xf32>
      %20 = tpu.matmul %18, %19, %cst_15 {dimension_numbers = #tpu.dot_dimension_numbers<[1], [0], [0], [1], [0, 0, 1, 1], [], []>} : vector<1x96xf32>, vector<96x96xf32>, vector<1x96xf32> -> vector<1x96xf32>
      %c0_16 = arith.constant 0 : index
      %c0_17 = arith.constant 0 : index
      %21 = vector.load %arg16[%c0_16, %c0_17] : memref<1x96xf32, #tpu.memory_space<vmem>>, vector<1x96xf32>
      %c0_18 = arith.constant 0 : index
      %c0_19 = arith.constant 0 : index
      %22 = vector.load %arg6[%c0_18, %c0_19] : memref<96x96xf32, #tpu.memory_space<vmem>>, vector<96x96xf32>
      %cst_20 = arith.constant dense<0.000000e+00> : vector<1x96xf32>
      %23 = tpu.matmul %21, %22, %cst_20 {dimension_numbers = #tpu.dot_dimension_numbers<[1], [0], [0], [1], [0, 0, 1, 1], [], []>} : vector<1x96xf32>, vector<96x96xf32>, vector<1x96xf32> -> vector<1x96xf32>
      %cst_21 = arith.constant 0.00130208337 : f32
      %24 = vector.broadcast %cst_21 : f32 to vector<1x96xf32>
      %25 = arith.mulf %20, %24 : vector<1x96xf32>
      %cst_22 = arith.constant 0.00130208337 : f32
      %26 = vector.broadcast %cst_22 : f32 to vector<1x96xf32>
      %27 = arith.mulf %23, %26 : vector<1x96xf32>
      %28 = arith.mulf %25, %25 : vector<1x96xf32>
      %29 = arith.subf %27, %28 : vector<1x96xf32>
      %cst_23 = arith.constant 9.99999974E-6 : f32
      %30 = vector.broadcast %cst_23 : f32 to vector<1x96xf32>
      %31 = arith.addf %29, %30 : vector<1x96xf32>
      %32 = math.rsqrt %31 : vector<1x96xf32>
      %c0_24 = arith.constant 0 : index
      %c0_25 = arith.constant 0 : index
      %33 = vector.load %arg7[%c0_24, %c0_25] : memref<1x96xf32, #tpu.memory_space<vmem>>, vector<1x96xf32>
      %34 = arith.mulf %32, %33 : vector<1x96xf32>
      %c0_26 = arith.constant 0 : index
      %c0_27 = arith.constant 0 : index
      %35 = vector.load %arg8[%c0_26, %c0_27] : memref<1x96xf32, #tpu.memory_space<vmem>>, vector<1x96xf32>
      %36 = arith.mulf %25, %34 : vector<1x96xf32>
      %37 = arith.subf %35, %36 : vector<1x96xf32>
      %38 = vector.broadcast %34 : vector<1x96xf32> to vector<256x96xf32>
      %39 = arith.mulf %11, %38 : vector<256x96xf32>
      %40 = vector.broadcast %37 : vector<1x96xf32> to vector<256x96xf32>
      %41 = arith.addf %39, %40 : vector<256x96xf32>
      %cst_28 = arith.constant 0.000000e+00 : f32
      %42 = vector.broadcast %cst_28 : f32 to vector<256x96xf32>
      %43 = arith.maximumf %41, %42 : vector<256x96xf32>
      %c0_29 = arith.constant 0 : index
      %c0_30 = arith.constant 0 : index
      %44 = vector.load %arg9[%c0_29, %c0_30] : memref<3x96xf32, #tpu.memory_space<vmem>>, vector<3x96xf32>
      %cst_31 = arith.constant dense<0.000000e+00> : vector<3x256xf32>
      %45 = tpu.matmul %44, %43, %cst_31 {dimension_numbers = #tpu.dot_dimension_numbers<[1], [1], [0], [0], [0, 0, 1, 0], [], []>} : vector<3x96xf32>, vector<256x96xf32>, vector<3x256xf32> -> vector<3x256xf32>
      %c0_32 = arith.constant 0 : index
      %c0_33 = arith.constant 0 : index
      %46 = vector.load %arg10[%c0_32, %c0_33] : memref<3x1xf32, #tpu.memory_space<vmem>>, vector<3x1xf32>
      %47 = vector.broadcast %46 : vector<3x1xf32> to vector<3x256xf32>
      %48 = arith.addf %45, %47 : vector<3x256xf32>
      %49 = arith.negf %48 : vector<3x256xf32>
      %50 = math.exp %49 : vector<3x256xf32>
      %cst_34 = arith.constant 1.000000e+00 : f32
      %51 = vector.broadcast %cst_34 : f32 to vector<3x256xf32>
      %52 = arith.addf %51, %50 : vector<3x256xf32>
      %53 = arith.divf %51, %52 : vector<3x256xf32>
      %cst_35 = arith.constant 9.99999974E-5 : f32
      %cst_36 = arith.constant 0.999899983 : f32
      %54 = vector.broadcast %cst_35 : f32 to vector<3x256xf32>
      %55 = arith.maximumf %54, %53 : vector<3x256xf32>
      %56 = vector.broadcast %cst_36 : f32 to vector<3x256xf32>
      %57 = arith.minimumf %56, %55 : vector<3x256xf32>
      %c0_37 = arith.constant 0 : index
      %c0_38 = arith.constant 0 : index
      %c0_39 = arith.constant 0 : index
      %58 = vector.load %arg13[%c0_37, %c0_38, %c0_39] : memref<1x3x256xf32, #tpu.memory_space<vmem>>, vector<1x3x256xf32>
      %59 = vector.shape_cast %58 : vector<1x3x256xf32> to vector<3x256xf32>
      %60 = vector.shape_cast %57 : vector<3x256xf32> to vector<1x3x256xf32>
      tpu.vector_store %arg13[%c0_37, %c0_38, %c0_39], %60 {strides = array<i32>} : memref<1x3x256xf32, #tpu.memory_space<vmem>>, vector<1x3x256xf32>,
      %c0_40 = arith.constant 0 : index
      %c0_41 = arith.constant 0 : index
      %61 = vector.load %arg11[%c0_40, %c0_41] : memref<8x96xf32, #tpu.memory_space<vmem>>, vector<8x96xf32>
      %cst_42 = arith.constant dense<0.000000e+00> : vector<8x256xf32>
      %62 = tpu.matmul %61, %43, %cst_42 {dimension_numbers = #tpu.dot_dimension_numbers<[1], [1], [0], [0], [0, 0, 1, 0], [], []>} : vector<8x96xf32>, vector<256x96xf32>, vector<8x256xf32> -> vector<8x256xf32>
      %c0_43 = arith.constant 0 : index
      %c0_44 = arith.constant 0 : index
      %63 = vector.load %arg12[%c0_43, %c0_44] : memref<8x1xf32, #tpu.memory_space<vmem>>, vector<8x1xf32>
      %64 = vector.broadcast %63 : vector<8x1xf32> to vector<8x256xf32>
      %65 = arith.addf %62, %64 : vector<8x256xf32>
      %66 = tpu.iota {dimensions = array<i32: 0>} : vector<8x256xi32>
      %67 = math.tanh %65 : vector<8x256xf32>
      %68 = arith.negf %65 : vector<8x256xf32>
      %69 = math.exp %68 : vector<8x256xf32>
      %cst_45 = arith.constant 1.000000e+00 : f32
      %70 = vector.broadcast %cst_45 : f32 to vector<8x256xf32>
      %71 = arith.addf %70, %69 : vector<8x256xf32>
      %72 = arith.divf %70, %71 : vector<8x256xf32>
      %cst_46 = arith.constant 5.000000e-01 : f32
      %73 = vector.broadcast %cst_46 : f32 to vector<8x256xf32>
      %74 = arith.subf %72, %73 : vector<8x256xf32>
      %c6_i32 = arith.constant 6 : i32
      %75 = vector.broadcast %c6_i32 : i32 to vector<8x256xi32>
      %76 = arith.cmpi sge, %66, %75 : vector<8x256xi32>
      %77 = arith.mulf %65, %65 : vector<8x256xf32>
      %cst_47 = arith.constant 0.000000e+00 : f32
      %78 = vector.broadcast %cst_47 : f32 to vector<8x256xf32>
      %79 = arith.select %76, %77, %78 : vector<8x256xi1>, vector<8x256xf32>
      %cst_48 = arith.constant dense<0.000000e+00> : vector<256xf32>
      %80 = vector.multi_reduction <add>, %79, %cst_48 [0] : vector<8x256xf32> to vector<256xf32>
      %81 = vector.shape_cast %80 : vector<256xf32> to vector<1x256xf32>
      %cst_49 = arith.constant 1.000000e-24 : f32
      %82 = vector.broadcast %cst_49 : f32 to vector<1x256xf32>
      %83 = arith.maximumf %81, %82 : vector<1x256xf32>
      %84 = math.rsqrt %83 : vector<1x256xf32>
      %85 = vector.broadcast %84 : vector<1x256xf32> to vector<8x256xf32>
      %86 = arith.mulf %65, %85 : vector<8x256xf32>
      %c3_i32 = arith.constant 3 : i32
      %87 = vector.broadcast %c3_i32 : i32 to vector<8x256xi32>
      %88 = arith.cmpi slt, %66, %87 : vector<8x256xi32>
      %c6_i32_50 = arith.constant 6 : i32
      %89 = vector.broadcast %c6_i32_50 : i32 to vector<8x256xi32>
      %90 = arith.cmpi slt, %66, %89 : vector<8x256xi32>
      %91 = arith.select %90, %74, %86 : vector<8x256xi1>, vector<8x256xf32>
      %92 = arith.select %88, %67, %91 : vector<8x256xi1>, vector<8x256xf32>
      %c0_51 = arith.constant 0 : index
      %c0_52 = arith.constant 0 : index
      %c0_53 = arith.constant 0 : index
      %93 = vector.load %arg14[%c0_51, %c0_52, %c0_53] : memref<1x8x256xf32, #tpu.memory_space<vmem>>, vector<1x8x256xf32>
      %94 = vector.shape_cast %93 : vector<1x8x256xf32> to vector<8x256xf32>
      %95 = vector.shape_cast %92 : vector<8x256xf32> to vector<1x8x256xf32>
      tpu.vector_store %arg14[%c0_51, %c0_52, %c0_53], %95 {strides = array<i32>} : memref<1x8x256xf32, #tpu.memory_space<vmem>>, vector<1x8x256xf32>,
    } else {
    }
    return
  }
  func.func @transform_0(%arg0: i32, %arg1: i32, %arg2: i32) -> (i32, i32, i32) {
    %c0_i32 = arith.constant 0 : i32
    %c0_i32_0 = arith.constant 0 : i32
    return %arg0, %arg2, %c0_i32 : i32, i32, i32
  }
  func.func @transform_1(%arg0: i32, %arg1: i32, %arg2: i32) -> (i32, i32) {
    %c0_i32 = arith.constant 0 : i32
    %c0_i32_0 = arith.constant 0 : i32
    %c0_i32_1 = arith.constant 0 : i32
    return %c0_i32, %c0_i32_0 : i32, i32
  }
  func.func @transform_2(%arg0: i32, %arg1: i32, %arg2: i32) -> (i32, i32) {
    %c0_i32 = arith.constant 0 : i32
    %c0_i32_0 = arith.constant 0 : i32
    %c0_i32_1 = arith.constant 0 : i32
    return %c0_i32, %c0_i32_0 : i32, i32
  }
  func.func @transform_3(%arg0: i32, %arg1: i32, %arg2: i32) -> (i32, i32) {
    %c0_i32 = arith.constant 0 : i32
    %c0_i32_0 = arith.constant 0 : i32
    %c0_i32_1 = arith.constant 0 : i32
    return %c0_i32, %c0_i32_0 : i32, i32
  }
  func.func @transform_4(%arg0: i32, %arg1: i32, %arg2: i32) -> (i32, i32) {
    %c0_i32 = arith.constant 0 : i32
    %c0_i32_0 = arith.constant 0 : i32
    %c0_i32_1 = arith.constant 0 : i32
    return %c0_i32, %c0_i32_0 : i32, i32
  }
  func.func @transform_5(%arg0: i32, %arg1: i32, %arg2: i32) -> (i32, i32) {
    %c0_i32 = arith.constant 0 : i32
    %c0_i32_0 = arith.constant 0 : i32
    %c0_i32_1 = arith.constant 0 : i32
    return %c0_i32, %c0_i32_0 : i32, i32
  }
  func.func @transform_6(%arg0: i32, %arg1: i32, %arg2: i32) -> (i32, i32) {
    %c0_i32 = arith.constant 0 : i32
    %c0_i32_0 = arith.constant 0 : i32
    %c0_i32_1 = arith.constant 0 : i32
    return %c0_i32, %c0_i32_0 : i32, i32
  }
  func.func @transform_7(%arg0: i32, %arg1: i32, %arg2: i32) -> (i32, i32) {
    %c0_i32 = arith.constant 0 : i32
    %c0_i32_0 = arith.constant 0 : i32
    %c0_i32_1 = arith.constant 0 : i32
    return %c0_i32, %c0_i32_0 : i32, i32
  }
  func.func @transform_8(%arg0: i32, %arg1: i32, %arg2: i32) -> (i32, i32) {
    %c0_i32 = arith.constant 0 : i32
    %c0_i32_0 = arith.constant 0 : i32
    %c0_i32_1 = arith.constant 0 : i32
    return %c0_i32, %c0_i32_0 : i32, i32
  }
  func.func @transform_9(%arg0: i32, %arg1: i32, %arg2: i32) -> (i32, i32) {
    %c0_i32 = arith.constant 0 : i32
    %c0_i32_0 = arith.constant 0 : i32
    %c0_i32_1 = arith.constant 0 : i32
    return %c0_i32, %c0_i32_0 : i32, i32
  }
  func.func @transform_10(%arg0: i32, %arg1: i32, %arg2: i32) -> (i32, i32, i32) {
    %c0_i32 = arith.constant 0 : i32
    %c0_i32_0 = arith.constant 0 : i32
    return %arg0, %c0_i32, %arg2 : i32, i32, i32
  }
  func.func @transform_11(%arg0: i32, %arg1: i32, %arg2: i32) -> (i32, i32, i32) {
    %c0_i32 = arith.constant 0 : i32
    %c0_i32_0 = arith.constant 0 : i32
    return %arg0, %c0_i32, %arg2 : i32, i32, i32
  }
}

</mosaic_0001>

<llo_original>
// kernel: tpu_custom_call.1
$region0: #{tpu_custom_call.1}
  #allocation0 [shape = 'u32[]', space=smem, size = 0x4, offset = 0x4, fixed_abs, tag = 'smem constant byte address 0x4 - core index']
  #allocation1 [shape = 'u32[72,128]{1,0:T(1,128)}', space=vmem, size = 0x9000, scoped, tag = 'internal scratch']
  #allocation2 [shape = 'f32[1,96]{1,0:T(1,128)}', space=vmem, size = 0x200, scoped, tag = 'scratch operand']
  #allocation3 [shape = 'f32[1,96]{1,0:T(1,128)}', space=vmem, size = 0x200, scoped, tag = 'scratch operand']
  %s0 = inlined_call_operand.vmem [shape: bf16[2,256,216], index: 0, kind: input, shape index: {}]
  %s1 = inlined_call_operand.vmem [shape: bf16[216,96], index: 1, kind: input, shape index: {}]
  %s2 = inlined_call_operand.vmem [shape: f32[1,96], index: 2, kind: input, shape index: {}]
  %s3 = inlined_call_operand.vmem [shape: f32[96,96], index: 3, kind: input, shape index: {}]
  %s4 = inlined_call_operand.vmem [shape: f32[1,96], index: 4, kind: input, shape index: {}]
  %s5 = inlined_call_operand.vmem [shape: f32[1,96], index: 5, kind: input, shape index: {}]
  %s6 = inlined_call_operand.vmem [shape: f32[3,96], index: 6, kind: input, shape index: {}]
  %s7 = inlined_call_operand.vmem [shape: f32[3,1], index: 7, kind: input, shape index: {}]
  %s8 = inlined_call_operand.vmem [shape: f32[8,96], index: 8, kind: input, shape index: {}]
  %s9 = inlined_call_operand.vmem [shape: f32[8,1], index: 9, kind: input, shape index: {}]
  %s10 = inlined_call_operand.vmem [shape: f32[2,3,256], index: 10, kind: output, shape index: {0}]
  %s11 = inlined_call_operand.hbm [shape: f32[2,8,256], index: 11, kind: output, shape index: {1}]
  %12 = xla_tuple %s10, %s11
  %s13 = sld [smem:[#allocation0]]
  $region93: #{tpu_custom_call.1} parent=0
    _
  %s15 = ssub.s32 1, %s13
  %s16 = scalar_select 0, %s15, %s13
  $region1: #{tpu_custom_call.1} parent=0
    #allocation4 [shape = 'u8[16384]{0}', space=vmem, size = 0x4000, scoped, tag = 'output window, operand 1']
    #allocation5 [shape = 's32[2]{0}', space=sflag, size = 0x8, scoped, tag = 'scoped memory for tpu_custom_call.1']
    %17 = vsyncpa [#allocation5], 0
    %s18 = scalar_lea.sflag [#allocation5], 1
    %19 = vsyncpa %s18, 0
    loop: start=0, step=1, limit=6
    $region2: #{tpu_custom_call.1} parent=1 // loop_pre_header
      _
    $region3: #{tpu_custom_call.1} parent=1 // loop_header
      %s21 = sphi 0, %s25
      %p22 = scmp.ge.s32.totalorder %s21, 6
      %s28 = sphi 0, %s47
      %s29 = sphi 0, %s43
      %s30 = sphi 0, %s39
      %s31 = sphi 0, %s28
      %s32 = sphi 0, %s29
      %s33 = sphi 0, %s30
      %s34 = sphi 0, %s31
      %s35 = sphi 0, %s32
      %s36 = sphi 0, %s33
      %s52 = sphi 0, %s54
      %s55 = sphi 0, %s52
      %s56 = sphi 0, %s55
      %s72 = sphi 0, %s56
      %s76 = sphi 0, %s76
      %s78 = sphi 0, %s76
      %s79 = sphi 0, %s78
      %s93 = sphi 0, %s79
      %s97 = sphi 0, %s97
      %s99 = sphi 0, %s97
      %s100 = sphi 0, %s99
      %s114 = sphi 0, %s100
      %s118 = sphi 0, %s118
      %s120 = sphi 0, %s118
      %s121 = sphi 0, %s120
      %s135 = sphi 0, %s121
      %s139 = sphi 0, %s139
      %s141 = sphi 0, %s139
      %s142 = sphi 0, %s141
      %s156 = sphi 0, %s142
      %s160 = sphi 0, %s160
      %s162 = sphi 0, %s160
      %s163 = sphi 0, %s162
      %s177 = sphi 0, %s163
      %s181 = sphi 0, %s181
      %s183 = sphi 0, %s181
      %s184 = sphi 0, %s183
      %s198 = sphi 0, %s184
      %s202 = sphi 0, %s202
      %s204 = sphi 0, %s202
      %s205 = sphi 0, %s204
      %s219 = sphi 0, %s205
      %s223 = sphi 0, %s223
      %s225 = sphi 0, %s223
      %s226 = sphi 0, %s225
      %s240 = sphi 0, %s226
      %s244 = sphi 0, %s244
      %s246 = sphi 0, %s244
      %s247 = sphi 0, %s246
      %s261 = sphi 0, %s247
      %s269 = sphi 0, %s271
      %s272 = sphi 0, %s269
      %s273 = sphi 0, %s272
      %s289 = sphi 0, %s273
      %s297 = sphi 0, %s299
      %s300 = sphi 0, %s297
      %s301 = sphi 0, %s300
      %s317 = sphi 0, %s301
    $region4: #{tpu_custom_call.1} parent=1 // loop_header_branch
      %24 = sbr.rel (%p22) target = $region8
    $region5: #{tpu_custom_call.1} parent=1 // loop_body
      %s26 = ssub.s32 %s21, 1
      %s27 = ssub.s32 %s21, 2
      %s37 = sadd.s32 1, %s30
      %p38 = scmp.ge.s32.totalorder %s37, 1
      %s39 = scalar_select %p38, 0, %s37
      %s40 = sadd.s32 1, %s29
      %s41 = scalar_select %p38, %s40, %s29
      %p42 = scmp.ge.s32.totalorder %s41, 2
      %s43 = scalar_select %p42, 0, %s41
      %s44 = sadd.s32 1, %s28
      %s45 = scalar_select %p42, %s44, %s28
      %p46 = scmp.ge.s32.totalorder %s45, 2
      %s47 = scalar_select %p46, 0, %s45
      %s48 = ssub.s32 %s28, %s47
      %s49 = ssub.s32 %s30, %s39
      %s50 = sor.u32 %s48, %s49
      %p51 = scmp.eq.s32.totalorder %s50, 0
      %s53 = sadd.s32 %s52, 1
      %s54 = scalar_select %p51, %s52, %s53
      %p57 = pneg %p51
      %p58 = scmp.eq.s32.totalorder %s21, 3
      %p59 = por %p57, %p58
      %p60 = scmp.ne.s32.totalorder %s52, %s55
      %p61 = scmp.eq.s32.totalorder %s21, 0
      %p62 = por %p60, %p61
      %p63 = scmp.ne.s32.totalorder %s52, %s55
      %p64 = scmp.eq.s32.totalorder %s26, 3
      %p65 = por %p63, %p64
      %p66 = scmp.ne.s32.totalorder %s55, %s56
      %p67 = scmp.eq.s32.totalorder %s26, 0
      %p68 = por %p66, %p67
      %p69 = scmp.ne.s32.totalorder %s55, %s56
      %p70 = scmp.eq.s32.totalorder %s27, 3
      %p71 = por %p69, %p70
      %p73 = scmp.ne.s32.totalorder %s56, %s72
      %p74 = scmp.eq.s32.totalorder %s27, 0
      %p75 = por %p73, %p74
      %s77 = sadd.s32 %s76, 1
      %p80 = scmp.eq.s32.totalorder %s21, 3
      %p81 = scmp.ne.s32.totalorder %s76, %s78
      %p82 = scmp.eq.s32.totalorder %s21, 0
      %p83 = por %p81, %p82
      %p84 = scmp.ne.s32.totalorder %s76, %s78
      %p85 = scmp.eq.s32.totalorder %s26, 3
      %p86 = por %p84, %p85
      %p87 = scmp.ne.s32.totalorder %s78, %s79
      %p88 = scmp.eq.s32.totalorder %s26, 0
      %p89 = por %p87, %p88
      %p90 = scmp.ne.s32.totalorder %s78, %s79
      %p91 = scmp.eq.s32.totalorder %s27, 3
      %p92 = por %p90, %p91
      %p94 = scmp.ne.s32.totalorder %s79, %s93
      %p95 = scmp.eq.s32.totalorder %s27, 0
      %p96 = por %p94, %p95
      %s98 = sadd.s32 %s97, 1
      %p101 = scmp.eq.s32.totalorder %s21, 3
      %p102 = scmp.ne.s32.totalorder %s97, %s99
      %p103 = scmp.eq.s32.totalorder %s21, 0
      %p104 = por %p102, %p103
      %p105 = scmp.ne.s32.totalorder %s97, %s99
      %p106 = scmp.eq.s32.totalorder %s26, 3
      %p107 = por %p105, %p106
      %p108 = scmp.ne.s32.totalorder %s99, %s100
      %p109 = scmp.eq.s32.totalorder %s26, 0
      %p110 = por %p108, %p109
      %p111 = scmp.ne.s32.totalorder %s99, %s100
      %p112 = scmp.eq.s32.totalorder %s27, 3
      %p113 = por %p111, %p112
      %p115 = scmp.ne.s32.totalorder %s100, %s114
      %p116 = scmp.eq.s32.totalorder %s27, 0
      %p117 = por %p115, %p116
      %s119 = sadd.s32 %s118, 1
      %p122 = scmp.eq.s32.totalorder %s21, 3
      %p123 = scmp.ne.s32.totalorder %s118, %s120
      %p124 = scmp.eq.s32.totalorder %s21, 0
      %p125 = por %p123, %p124
      %p126 = scmp.ne.s32.totalorder %s118, %s120
      %p127 = scmp.eq.s32.totalorder %s26, 3
      %p128 = por %p126, %p127
      %p129 = scmp.ne.s32.totalorder %s120, %s121
      %p130 = scmp.eq.s32.totalorder %s26, 0
      %p131 = por %p129, %p130
      %p132 = scmp.ne.s32.totalorder %s120, %s121
      %p133 = scmp.eq.s32.totalorder %s27, 3
      %p134 = por %p132, %p133
      %p136 = scmp.ne.s32.totalorder %s121, %s135
      %p137 = scmp.eq.s32.totalorder %s27, 0
      %p138 = por %p136, %p137
      %s140 = sadd.s32 %s139, 1
      %p143 = scmp.eq.s32.totalorder %s21, 3
      %p144 = scmp.ne.s32.totalorder %s139, %s141
      %p145 = scmp.eq.s32.totalorder %s21, 0
      %p146 = por %p144, %p145
      %p147 = scmp.ne.s32.totalorder %s139, %s141
      %p148 = scmp.eq.s32.totalorder %s26, 3
      %p149 = por %p147, %p148
      %p150 = scmp.ne.s32.totalorder %s141, %s142
      %p151 = scmp.eq.s32.totalorder %s26, 0
      %p152 = por %p150, %p151
      %p153 = scmp.ne.s32.totalorder %s141, %s142
      %p154 = scmp.eq.s32.totalorder %s27, 3
      %p155 = por %p153, %p154
      %p157 = scmp.ne.s32.totalorder %s142, %s156
      %p158 = scmp.eq.s32.totalorder %s27, 0
      %p159 = por %p157, %p158
      %s161 = sadd.s32 %s160, 1
      %p164 = scmp.eq.s32.totalorder %s21, 3
      %p165 = scmp.ne.s32.totalorder %s160, %s162
      %p166 = scmp.eq.s32.totalorder %s21, 0
      %p167 = por %p165, %p166
      %p168 = scmp.ne.s32.totalorder %s160, %s162
      %p169 = scmp.eq.s32.totalorder %s26, 3
      %p170 = por %p168, %p169
      %p171 = scmp.ne.s32.totalorder %s162, %s163
      %p172 = scmp.eq.s32.totalorder %s26, 0
      %p173 = por %p171, %p172
      %p174 = scmp.ne.s32.totalorder %s162, %s163
      %p175 = scmp.eq.s32.totalorder %s27, 3
      %p176 = por %p174, %p175
      %p178 = scmp.ne.s32.totalorder %s163, %s177
      %p179 = scmp.eq.s32.totalorder %s27, 0
      %p180 = por %p178, %p179
      %s182 = sadd.s32 %s181, 1
      %p185 = scmp.eq.s32.totalorder %s21, 3
      %p186 = scmp.ne.s32.totalorder %s181, %s183
      %p187 = scmp.eq.s32.totalorder %s21, 0
      %p188 = por %p186, %p187
      %p189 = scmp.ne.s32.totalorder %s181, %s183
      %p190 = scmp.eq.s32.totalorder %s26, 3
      %p191 = por %p189, %p190
      %p192 = scmp.ne.s32.totalorder %s183, %s184
      %p193 = scmp.eq.s32.totalorder %s26, 0
      %p194 = por %p192, %p193
      %p195 = scmp.ne.s32.totalorder %s183, %s184
      %p196 = scmp.eq.s32.totalorder %s27, 3
      %p197 = por %p195, %p196
      %p199 = scmp.ne.s32.totalorder %s184, %s198
      %p200 = scmp.eq.s32.totalorder %s27, 0
      %p201 = por %p199, %p200
      %s203 = sadd.s32 %s202, 1
      %p206 = scmp.eq.s32.totalorder %s21, 3
      %p207 = scmp.ne.s32.totalorder %s202, %s204
      %p208 = scmp.eq.s32.totalorder %s21, 0
      %p209 = por %p207, %p208
      %p210 = scmp.ne.s32.totalorder %s202, %s204
      %p211 = scmp.eq.s32.totalorder %s26, 3
      %p212 = por %p210, %p211
      %p213 = scmp.ne.s32.totalorder %s204, %s205
      %p214 = scmp.eq.s32.totalorder %s26, 0
      %p215 = por %p213, %p214
      %p216 = scmp.ne.s32.totalorder %s204, %s205
      %p217 = scmp.eq.s32.totalorder %s27, 3
      %p218 = por %p216, %p217
      %p220 = scmp.ne.s32.totalorder %s205, %s219
      %p221 = scmp.eq.s32.totalorder %s27, 0
      %p222 = por %p220, %p221
      %s224 = sadd.s32 %s223, 1
      %p227 = scmp.eq.s32.totalorder %s21, 3
      %p228 = scmp.ne.s32.totalorder %s223, %s225
      %p229 = scmp.eq.s32.totalorder %s21, 0
      %p230 = por %p228, %p229
      %p231 = scmp.ne.s32.totalorder %s223, %s225
      %p232 = scmp.eq.s32.totalorder %s26, 3
      %p233 = por %p231, %p232
      %p234 = scmp.ne.s32.totalorder %s225, %s226
      %p235 = scmp.eq.s32.totalorder %s26, 0
      %p236 = por %p234, %p235
      %p237 = scmp.ne.s32.totalorder %s225, %s226
      %p238 = scmp.eq.s32.totalorder %s27, 3
      %p239 = por %p237, %p238
      %p241 = scmp.ne.s32.totalorder %s226, %s240
      %p242 = scmp.eq.s32.totalorder %s27, 0
      %p243 = por %p241, %p242
      %s245 = sadd.s32 %s244, 1
      %p248 = scmp.eq.s32.totalorder %s21, 3
      %p249 = scmp.ne.s32.totalorder %s244, %s246
      %p250 = scmp.eq.s32.totalorder %s21, 0
      %p251 = por %p249, %p250
      %p252 = scmp.ne.s32.totalorder %s244, %s246
      %p253 = scmp.eq.s32.totalorder %s26, 3
      %p254 = por %p252, %p253
      %p255 = scmp.ne.s32.totalorder %s246, %s247
      %p256 = scmp.eq.s32.totalorder %s26, 0
      %p257 = por %p255, %p256
      %p258 = scmp.ne.s32.totalorder %s246, %s247
      %p259 = scmp.eq.s32.totalorder %s27, 3
      %p260 = por %p258, %p259
      %p262 = scmp.ne.s32.totalorder %s247, %s261
      %p263 = scmp.eq.s32.totalorder %s27, 0
      %p264 = por %p262, %p263
      %s265 = ssub.s32 %s28, %s47
      %s266 = ssub.s32 %s30, %s39
      %s267 = sor.u32 %s265, %s266
      %p268 = scmp.eq.s32.totalorder %s267, 0
      %s270 = sadd.s32 %s269, 1
      %s271 = scalar_select %p268, %s269, %s270
      %p274 = pneg %p268
      %p275 = scmp.eq.s32.totalorder %s21, 3
      %p276 = por %p274, %p275
      %p277 = scmp.ne.s32.totalorder %s269, %s272
      %p278 = scmp.eq.s32.totalorder %s21, 0
      %p279 = por %p277, %p278
      %p280 = scmp.ne.s32.totalorder %s269, %s272
      %p281 = scmp.eq.s32.totalorder %s26, 3
      %p282 = por %p280, %p281
      %p283 = scmp.ne.s32.totalorder %s272, %s273
      %p284 = scmp.eq.s32.totalorder %s26, 0
      %p285 = por %p283, %p284
      %p286 = scmp.ne.s32.totalorder %s272, %s273
      %p287 = scmp.eq.s32.totalorder %s27, 3
      %p288 = por %p286, %p287
      %p290 = scmp.ne.s32.totalorder %s273, %s289
      %p291 = scmp.eq.s32.totalorder %s27, 0
      %p292 = por %p290, %p291
      %s293 = ssub.s32 %s28, %s47
      %s294 = ssub.s32 %s30, %s39
      %s295 = sor.u32 %s293, %s294
      %p296 = scmp.eq.s32.totalorder %s295, 0
      %s298 = sadd.s32 %s297, 1
      %s299 = scalar_select %p296, %s297, %s298
      %p302 = pneg %p296
      %p303 = scmp.eq.s32.totalorder %s21, 3
      %p304 = por %p302, %p303
      %p305 = scmp.ne.s32.totalorder %s297, %s300
      %p306 = scmp.eq.s32.totalorder %s21, 0
      %p307 = por %p305, %p306
      %p308 = scmp.ne.s32.totalorder %s297, %s300
      %p309 = scmp.eq.s32.totalorder %s26, 3
      %p310 = por %p308, %p309
      %p311 = scmp.ne.s32.totalorder %s300, %s301
      %p312 = scmp.eq.s32.totalorder %s26, 0
      %p313 = por %p311, %p312
      %p314 = scmp.ne.s32.totalorder %s300, %s301
      %p315 = scmp.eq.s32.totalorder %s27, 3
      %p316 = por %p314, %p315
      %p318 = scmp.ne.s32.totalorder %s301, %s317
      %p319 = scmp.eq.s32.totalorder %s27, 0
      %p320 = por %p318, %p319
      %p321 = scmp.le.s32.totalorder 1, %s21
      %p322 = scmp.lt.s32.totalorder %s21, 5
      %p323 = pnand %p321, %p322
      %p324 = pneg %p323
      // Predicated region
      $region9: #{tpu_custom_call.1} parent=5 // pred_check
        _
      $region10: #{tpu_custom_call.1} parent=5 // pred_check_branch
        %326 = sbr.rel (%p323) target = $region12
      $region11: #{tpu_custom_call.1} parent=5 // pred_region
        %s327 = ssub.s32 %s21, 1
        // Predicated region
        $region13: #{tpu_custom_call.1} parent=11 // pred_check
          %p328 = pneg %p89
        $region14: #{tpu_custom_call.1} parent=11 // pred_check_branch
          %330 = sbr.rel (%p328) target = $region16
        $region15: #{tpu_custom_call.1} parent=11 // pred_region
          _
        $region16: #{tpu_custom_call.1} parent=11 // pred_fallthru
          _
        // Predicated region
        $region17: #{tpu_custom_call.1} parent=11 // pred_check
          %p331 = pneg %p110
        $region18: #{tpu_custom_call.1} parent=11 // pred_check_branch
          %333 = sbr.rel (%p331) target = $region20
        $region19: #{tpu_custom_call.1} parent=11 // pred_region
          _
        $region20: #{tpu_custom_call.1} parent=11 // pred_fallthru
          _
        // Predicated region
        $region21: #{tpu_custom_call.1} parent=11 // pred_check
          %p334 = pneg %p131
        $region22: #{tpu_custom_call.1} parent=11 // pred_check_branch
          %336 = sbr.rel (%p334) target = $region24
        $region23: #{tpu_custom_call.1} parent=11 // pred_region
          _
        $region24: #{tpu_custom_call.1} parent=11 // pred_fallthru
          _
        // Predicated region
        $region25: #{tpu_custom_call.1} parent=11 // pred_check
          %p337 = pneg %p152
        $region26: #{tpu_custom_call.1} parent=11 // pred_check_branch
          %339 = sbr.rel (%p337) target = $region28
        $region27: #{tpu_custom_call.1} parent=11 // pred_region
          _
        $region28: #{tpu_custom_call.1} parent=11 // pred_fallthru
          _
        // Predicated region
        $region29: #{tpu_custom_call.1} parent=11 // pred_check
          %p340 = pneg %p173
        $region30: #{tpu_custom_call.1} parent=11 // pred_check_branch
          %342 = sbr.rel (%p340) target = $region32
        $region31: #{tpu_custom_call.1} parent=11 // pred_region
          _
        $region32: #{tpu_custom_call.1} parent=11 // pred_fallthru
          _
        // Predicated region
        $region33: #{tpu_custom_call.1} parent=11 // pred_check
          %p343 = pneg %p194
        $region34: #{tpu_custom_call.1} parent=11 // pred_check_branch
          %345 = sbr.rel (%p343) target = $region36
        $region35: #{tpu_custom_call.1} parent=11 // pred_region
          _
        $region36: #{tpu_custom_call.1} parent=11 // pred_fallthru
          _
        // Predicated region
        $region37: #{tpu_custom_call.1} parent=11 // pred_check
          %p346 = pneg %p215
        $region38: #{tpu_custom_call.1} parent=11 // pred_check_branch
          %348 = sbr.rel (%p346) target = $region40
        $region39: #{tpu_custom_call.1} parent=11 // pred_region
          _
        $region40: #{tpu_custom_call.1} parent=11 // pred_fallthru
          _
        // Predicated region
        $region41: #{tpu_custom_call.1} parent=11 // pred_check
          %p349 = pneg %p236
        $region42: #{tpu_custom_call.1} parent=11 // pred_check_branch
          %351 = sbr.rel (%p349) target = $region44
        $region43: #{tpu_custom_call.1} parent=11 // pred_region
          _
        $region44: #{tpu_custom_call.1} parent=11 // pred_fallthru
          _
        // Predicated region
        $region45: #{tpu_custom_call.1} parent=11 // pred_check
          %p352 = pneg %p257
        $region46: #{tpu_custom_call.1} parent=11 // pred_check_branch
          %354 = sbr.rel (%p352) target = $region48
        $region47: #{tpu_custom_call.1} parent=11 // pred_region
          _
        $region48: #{tpu_custom_call.1} parent=11 // pred_fallthru
          _
      $region12: #{tpu_custom_call.1} parent=5 // pred_fallthru
        _
      %p355 = scmp.lt.s32.totalorder %s21, 4
      // Predicated region
      $region49: #{tpu_custom_call.1} parent=5 // pred_check
        %p356 = pneg %p355
      $region50: #{tpu_custom_call.1} parent=5 // pred_check_branch
        %358 = sbr.rel (%p356) target = $region52
      $region51: #{tpu_custom_call.1} parent=5 // pred_region
        // Predicated region
        $region53: #{tpu_custom_call.1} parent=51 // pred_check
          %p359 = pneg %p62
        $region54: #{tpu_custom_call.1} parent=51 // pred_check_branch
          %361 = sbr.rel (%p359) target = $region56
        $region55: #{tpu_custom_call.1} parent=51 // pred_region
          %s362 = smul.u32 32, %s30
          %p363 = scmp.lt.s32.totalorder %s28, 1
          %s364 = scalar_select %p363, %s28, 1
          %p365 = scmp.lt.s32.totalorder %s362, 31
          %s366 = scalar_select %p365, %s362, 31
          %s367 = smul.addr %s366, 2
          %s368 = smul.addr %s364, 64
          %s369 = sadd.s32 %s367, %s368
          %s370 = smul.addr %s369, 4
          %s371 = scalar_lea.vmem %s0, %s370
          %s372 = smul.u32 32, %s30
        $region56: #{tpu_custom_call.1} parent=51 // pred_fallthru
          _
      $region52: #{tpu_custom_call.1} parent=5 // pred_fallthru
        _
      %p373 = scmp.le.s32.totalorder 1, %s21
      %p374 = scmp.lt.s32.totalorder %s21, 5
      %p375 = pnand %p373, %p374
      %p376 = pneg %p375
      // Predicated region
      $region57: #{tpu_custom_call.1} parent=5 // pred_check
        _
      $region58: #{tpu_custom_call.1} parent=5 // pred_check_branch
        %378 = sbr.rel (%p375) target = $region60
      $region59: #{tpu_custom_call.1} parent=5 // pred_region
        %s379 = ssub.s32 %s21, 1
        %s380 = smul.u32 32, %s33
        %p381 = scmp.lt.s32.totalorder %s31, 1
        %s382 = scalar_select %p381, %s31, 1
        %p383 = scmp.lt.s32.totalorder %s380, 31
        %s384 = scalar_select %p383, %s380, 31
        %s385 = smul.addr %s384, 2
        %s386 = smul.addr %s382, 64
        %s387 = sadd.s32 %s385, %s386
        %s388 = smul.addr %s387, 4
        %s389 = scalar_lea.vmem %s0, %s388
        %p390 = pneg %p68
        %p391 = pneg %p65
        %p392 = pneg %p89
        %p393 = pneg %p86
        %p394 = pneg %p110
        %p395 = pneg %p107
        %p396 = pneg %p131
        %p397 = pneg %p128
        %p398 = pneg %p152
        %p399 = pneg %p149
        %p400 = pneg %p173
        %p401 = pneg %p170
        %p402 = pneg %p194
        %p403 = pneg %p191
        %p404 = pneg %p215
        %p405 = pneg %p212
        %p406 = pneg %p236
        %p407 = pneg %p233
        %p408 = pneg %p257
        %p409 = pneg %p254
        %p410 = pneg %p285
        %p411 = pneg %p282
        %s412 = smul.u32 2, %s33
        %p413 = scmp.lt.s32.totalorder %s31, 1
        %s414 = scalar_select %p413, %s31, 1
        %p415 = scmp.lt.s32.totalorder %s412, 1
        %s416 = scalar_select %p415, %s412, 1
        %s417 = smul.addr %s414, 2
        %s418 = sadd.s32 %s416, %s417
        %s419 = smul.addr %s418, 4
        %s420 = scalar_lea.vmem %s10, %s419
        %p421 = pneg %p313
        %p422 = pneg %p310
        %s423 = sand.u32 %s300, 1
        %s424 = scalar_lea.sflag [#allocation5], %s423
        %s425 = sand.u32 %s300, 1
        %s426 = smul.addr %s425, 16
        %s427 = scalar_lea.vmem [#allocation4], %s426
        %s428 = smul.u32 32, %s33
        %p429 = scmp.lt.s32.totalorder %s31, 1
        %s430 = scalar_select %p429, %s31, 1
        %p431 = scmp.lt.s32.totalorder %s428, 31
        %s432 = scalar_select %p431, %s428, 31
        %s433 = smul.addr %s432, 2
        %s434 = smul.addr %s430, 64
        %s435 = sadd.s32 %s433, %s434
        %s436 = smul.addr %s435, 4
        %s437 = scalar_lea.vmem %s0, %s436
        %s438 = smul.u32 32, %s33
        %s439 = smul.u32 2, %s33
        %p440 = scmp.lt.s32.totalorder %s31, 1
        %s441 = scalar_select %p440, %s31, 1
        %p442 = scmp.lt.s32.totalorder %s439, 1
        %s443 = scalar_select %p442, %s439, 1
        %s444 = smul.addr %s441, 2
        %s445 = sadd.s32 %s443, %s444
        %s446 = smul.addr %s445, 4
        %s447 = scalar_lea.vmem %s10, %s446
        %s448 = smul.u32 2, %s33
        %s449 = smul.u32 2, %s33
        %p451 = scmp.eq.s32.totalorder %s32, 0
        %p452 = scmp.eq.s32.totalorder %s33, 0
        %p453 = pnand %p451, %p452
        %p454 = pneg %p453
        // Predicated region
        $region61: #{tpu_custom_call.1} parent=59 // pred_check
          _
        $region62: #{tpu_custom_call.1} parent=59 // pred_check_branch
          %456 = sbr.rel (%p453) target = $region64
        $region63: #{tpu_custom_call.1} parent=59 // pred_region
          %vm457 = vcmask 778240
          %458 = vst.msk [vmem:[#allocation2] sm:$0x1] %vm457, 0.0
          %459 = vst.msk [vmem:[#allocation3] sm:$0x1] %vm457, 0.0
        $region64: #{tpu_custom_call.1} parent=59 // pred_fallthru
          _
        %v460 = vld [vmem:[%s437] sm:$0xff]
        %v461 = vld [vmem:[%s437 + $0x8] sm:$0xff]
        %v462 = vld [vmem:[%s437 + $0x10] sm:$0xff]
        %v463 = vld [vmem:[%s437 + $0x18] sm:$0xff]
        %v464 = vld [vmem:[%s437 + $0x20] sm:$0xff]
        %v465 = vld [vmem:[%s437 + $0x28] sm:$0xff]
        %v466 = vld [vmem:[%s437 + $0x30] sm:$0xff]
        %v467 = vld [vmem:[%s437 + $0x38] sm:$0xff]
        %v468 = vld [vmem:[%s437 + $0x40] sm:$0xff]
        %v469 = vld [vmem:[%s437 + $0x48] sm:$0xff]
        %v470 = vld [vmem:[%s437 + $0x50] sm:$0xff]
        %v471 = vld [vmem:[%s437 + $0x58] sm:$0xff]
        %v472 = vld [vmem:[%s437 + $0x60] sm:$0xff]
        %v473 = vld [vmem:[%s437 + $0x68] sm:$0xff]
        %v474 = vld [vmem:[%s437 + $0x70] sm:$0xff]
        %v475 = vld [vmem:[%s437 + $0x78] sm:$0xff]
        %v476 = vld [vmem:[%s437 + $0x80] sm:$0xff]
        %v477 = vld [vmem:[%s437 + $0x88] sm:$0xff]
        %v478 = vld [vmem:[%s437 + $0x90] sm:$0xff]
        %v479 = vld [vmem:[%s437 + $0x98] sm:$0xff]
        %v480 = vld [vmem:[%s437 + $0xa0] sm:$0xff]
        %v481 = vld [vmem:[%s437 + $0xa8] sm:$0xff]
        %v482 = vld [vmem:[%s437 + $0xb0] sm:$0xff]
        %v483 = vld [vmem:[%s437 + $0xb8] sm:$0xff]
        %v484 = vld [vmem:[%s437 + $0xc0] sm:$0xff]
        %v485 = vld [vmem:[%s437 + $0xc8] sm:$0xff]
        %v486 = vld [vmem:[%s437 + $0xd0] sm:$0xff]
        %v487 = vld [vmem:[%s437 + $0xd8] sm:$0xff]
        %v488 = vld [vmem:[%s437 + $0xe0] sm:$0xff]
        %v489 = vld [vmem:[%s437 + $0xe8] sm:$0xff]
        %v490 = vld [vmem:[%s437 + $0xf0] sm:$0xff]
        %v491 = vld [vmem:[%s437 + $0xf8] sm:$0xff]
        %v492 = vld [vmem:[%s1] sm:$0xf]
        %v493 = vld [vmem:[%s1 + $0x4] sm:$0xf]
        %v494 = vld [vmem:[%s1 + $0x8] sm:$0xf]
        %v495 = vld [vmem:[%s1 + $0xc] sm:$0xf]
        %v496 = vld [vmem:[%s1 + $0x10] sm:$0xf]
        %v497 = vld [vmem:[%s1 + $0x14] sm:$0xf]
        %v498 = vld [vmem:[%s1 + $0x18] sm:$0xf]
        %v499 = vld [vmem:[%s1 + $0x1c] sm:$0xf]
        %v500 = vld [vmem:[%s1 + $0x20] sm:$0xf]
        %v501 = vld [vmem:[%s1 + $0x24] sm:$0xf]
        %v502 = vld [vmem:[%s1 + $0x28] sm:$0xf]
        %v503 = vld [vmem:[%s1 + $0x2c] sm:$0xf]
        %v504 = vld [vmem:[%s1 + $0x30] sm:$0xf]
        %v505 = vld [vmem:[%s1 + $0x34] sm:$0xf]
        %v506 = vld [vmem:[%s1 + $0x38] sm:$0xf]
        %v507 = vld [vmem:[%s1 + $0x3c] sm:$0xf]
        %v508 = vld [vmem:[%s1 + $0x40] sm:$0xf]
        %v509 = vld [vmem:[%s1 + $0x44] sm:$0xf]
        %v510 = vld [vmem:[%s1 + $0x48] sm:$0xf]
        %v511 = vld [vmem:[%s1 + $0x4c] sm:$0xf]
        %v512 = vld [vmem:[%s1 + $0x50] sm:$0xf]
        %v513 = vld [vmem:[%s1 + $0x54] sm:$0xf]
        %v514 = vld [vmem:[%s1 + $0x58] sm:$0xf]
        %v515 = vld [vmem:[%s1 + $0x5c] sm:$0xf]
        %v516 = vld [vmem:[%s1 + $0x60] sm:$0xf]
        %v517 = vld [vmem:[%s1 + $0x64] sm:$0xf]
        %v518 = vld [vmem:[%s1 + $0x68] sm:$0xf]
        %v519 = vld [vmem:[%s2] sm:$0x1]
        %v521 = vperm.slane %v519, 0
        %v555 = vunpack.c.l.b16 %v460
        %v556 = vunpack.c.h.b16 %v460
        %v557 = vunpack.c.l.b16 %v461
        %v558 = vunpack.c.h.b16 %v461
        %v559 = vunpack.c.l.b16 %v462
        %v560 = vunpack.c.h.b16 %v462
        %v561 = vunpack.c.l.b16 %v463
        %v562 = vunpack.c.h.b16 %v463
        %v563 = vunpack.c.l.b16 %v464
        %v564 = vunpack.c.h.b16 %v464
        %v565 = vunpack.c.l.b16 %v465
        %v566 = vunpack.c.h.b16 %v465
        %v567 = vunpack.c.l.b16 %v466
        %v568 = vunpack.c.h.b16 %v466
        %v569 = vunpack.c.l.b16 %v467
        %v570 = vunpack.c.h.b16 %v467
        %v571 = vunpack.c.l.b16 %v468
        %v572 = vunpack.c.h.b16 %v468
        %v573 = vunpack.c.l.b16 %v469
        %v574 = vunpack.c.h.b16 %v469
        %v575 = vunpack.c.l.b16 %v470
        %v576 = vunpack.c.h.b16 %v470
        %v577 = vunpack.c.l.b16 %v471
        %v578 = vunpack.c.h.b16 %v471
        %v579 = vunpack.c.l.b16 %v472
        %v580 = vunpack.c.h.b16 %v472
        %v581 = vunpack.c.l.b16 %v473
        %v582 = vunpack.c.h.b16 %v473
        %v583 = vunpack.c.l.b16 %v474
        %v584 = vunpack.c.h.b16 %v474
        %v585 = vunpack.c.l.b16 %v475
        %v586 = vunpack.c.h.b16 %v475
        %v587 = vunpack.c.l.b16 %v476
        %v588 = vunpack.c.h.b16 %v476
        %v589 = vunpack.c.l.b16 %v477
        %v590 = vunpack.c.h.b16 %v477
        %v591 = vunpack.c.l.b16 %v478
        %v592 = vunpack.c.h.b16 %v478
        %v593 = vunpack.c.l.b16 %v479
        %v594 = vunpack.c.h.b16 %v479
        %v595 = vunpack.c.l.b16 %v480
        %v596 = vunpack.c.h.b16 %v480
        %v597 = vunpack.c.l.b16 %v481
        %v598 = vunpack.c.h.b16 %v481
        %v599 = vunpack.c.l.b16 %v482
        %v600 = vunpack.c.h.b16 %v482
        %v601 = vunpack.c.l.b16 %v483
        %v602 = vunpack.c.h.b16 %v483
        %v603 = vunpack.c.l.b16 %v484
        %v604 = vunpack.c.h.b16 %v484
        %v605 = vunpack.c.l.b16 %v485
        %v606 = vunpack.c.h.b16 %v485
        %v607 = vunpack.c.l.b16 %v486
        %v608 = vunpack.c.h.b16 %v486
        %v609 = vunpack.c.l.b16 %v487
        %v610 = vunpack.c.h.b16 %v487
        %v611 = vunpack.c.l.b16 %v488
        %v612 = vunpack.c.h.b16 %v488
        %v613 = vunpack.c.l.b16 %v489
        %v614 = vunpack.c.h.b16 %v489
        %v615 = vunpack.c.l.b16 %v490
        %v616 = vunpack.c.h.b16 %v490
        %v617 = vunpack.c.l.b16 %v491
        %v618 = vunpack.c.h.b16 %v491
        %v619 = vpack.c.b16 %v557, %v555
        %v620 = vpack.c.b16 %v558, %v556
        %v621 = vpack.c.b16 %v561, %v559
        %v622 = vpack.c.b16 %v562, %v560
        %v623 = vpack.c.b16 %v565, %v563
        %v624 = vpack.c.b16 %v566, %v564
        %v625 = vpack.c.b16 %v569, %v567
        %v626 = vpack.c.b16 %v570, %v568
        %v627 = vpack.c.b16 %v573, %v571
        %v628 = vpack.c.b16 %v574, %v572
        %v629 = vpack.c.b16 %v577, %v575
        %v630 = vpack.c.b16 %v578, %v576
        %v631 = vpack.c.b16 %v581, %v579
        %v632 = vpack.c.b16 %v582, %v580
        %v633 = vpack.c.b16 %v585, %v583
        %v634 = vpack.c.b16 %v586, %v584
        %v635 = vpack.c.b16 %v589, %v587
        %v636 = vpack.c.b16 %v590, %v588
        %v637 = vpack.c.b16 %v593, %v591
        %v638 = vpack.c.b16 %v594, %v592
        %v639 = vpack.c.b16 %v597, %v595
        %v640 = vpack.c.b16 %v598, %v596
        %v641 = vpack.c.b16 %v601, %v599
        %v642 = vpack.c.b16 %v602, %v600
        %v643 = vpack.c.b16 %v605, %v603
        %v644 = vpack.c.b16 %v606, %v604
        %v645 = vpack.c.b16 %v609, %v607
        %v646 = vpack.c.b16 %v610, %v608
        %v647 = vpack.c.b16 %v613, %v611
        %v648 = vpack.c.b16 %v614, %v612
        %v649 = vpack.c.b16 %v617, %v615
        %v650 = vpack.c.b16 %v618, %v616
        %v694 = vunpack.c.l.b16 %v492
        %v695 = vunpack.c.l.b16 %v493
        %v696 = vunpack.c.l.b16 %v494
        %v697 = vunpack.c.l.b16 %v495
        %v698 = vunpack.c.l.b16 %v496
        %v699 = vunpack.c.l.b16 %v497
        %v700 = vunpack.c.l.b16 %v498
        %v701 = vunpack.c.l.b16 %v499
        %v702 = vunpack.c.l.b16 %v500
        %v703 = vunpack.c.l.b16 %v501
        %v704 = vunpack.c.l.b16 %v502
        %v705 = vunpack.c.l.b16 %v503
        %v706 = vunpack.c.l.b16 %v504
        %v707 = vunpack.c.l.b16 %v505
        %v708 = vunpack.c.l.b16 %v506
        %v709 = vunpack.c.l.b16 %v507
        %v710 = vunpack.c.l.b16 %v508
        %v711 = vunpack.c.l.b16 %v509
        %v712 = vunpack.c.l.b16 %v510
        %v713 = vunpack.c.l.b16 %v511
        %v714 = vunpack.c.l.b16 %v512
        %v715 = vunpack.c.l.b16 %v513
        %v716 = vunpack.c.l.b16 %v514
        %v717 = vunpack.c.l.b16 %v515
        %v718 = vunpack.c.l.b16 %v516
        %v719 = vunpack.c.l.b16 %v517
        %v720 = vunpack.c.l.b16 %v518
        %v721 = vpack.c.b16 %v695, %v694
        %v722 = vpack.c.b16 %v697, %v696
        %v723 = vpack.c.b16 %v699, %v698
        %v724 = vpack.c.b16 %v701, %v700
        %v725 = vpack.c.b16 %v703, %v702
        %v726 = vpack.c.b16 %v705, %v704
        %v727 = vpack.c.b16 %v707, %v706
        %v728 = vpack.c.b16 %v709, %v708
        %v729 = vpack.c.b16 %v711, %v710
        %v730 = vpack.c.b16 %v713, %v712
        %v731 = vpack.c.b16 %v715, %v714
        %v732 = vpack.c.b16 %v717, %v716
        %v733 = vpack.c.b16 %v719, %v718
        %v734 = vpack.c.b16 %v720, %v720
        %vm748 = vcmask 719872
        %v750 = vsel %vm748, %v620, 0
        %v753 = vsel %vm748, %v622, 0
        %v756 = vsel %vm748, %v624, 0
        %v759 = vsel %vm748, %v626, 0
        %v762 = vsel %vm748, %v628, 0
        %v765 = vsel %vm748, %v630, 0
        %v768 = vsel %vm748, %v632, 0
        %v771 = vsel %vm748, %v634, 0
        %v774 = vsel %vm748, %v636, 0
        %v777 = vsel %vm748, %v638, 0
        %v780 = vsel %vm748, %v640, 0
        %v783 = vsel %vm748, %v642, 0
        %v786 = vsel %vm748, %v644, 0
        %v789 = vsel %vm748, %v646, 0
        %v792 = vsel %vm748, %v648, 0
        %v795 = vsel %vm748, %v650, 0
        %vm797 = vcmask 1043456
        %v799 = vsel %vm797, %v734, 0
        %801 = vmatpush.bf16.msra.mxu0 %v728
        %802 = vmatpush.bf16.msra.mxu0 %v727
        %803 = vmatpush.bf16.msra.mxu0 %v726
        %804 = vmatpush.bf16.msra.mxu0 %v725
        %805 = vmatpush.bf16.msra.mxu0 %v724
        %806 = vmatpush.bf16.msra.mxu0 %v723
        %807 = vmatpush.bf16.msra.mxu0 %v722
        %808 = vmatpush.bf16.msra.mxu0 %v721
        %809 = vmatmul.bf16.gmra.mxu0 %v619
        %v810 = vpop.f32.mrf.mxu0
        %v811 = vadd.f32 %v521, %v810
        %v812 = vpop.f32.mrf.mxu0
        %v813 = vadd.f32 %v521, %v812
        %814 = vmatmul.bf16.gmra.mxu0 %v621
        %v815 = vpop.f32.mrf.mxu0
        %v816 = vadd.f32 %v521, %v815
        %v817 = vpop.f32.mrf.mxu0
        %v818 = vadd.f32 %v521, %v817
        %819 = vmatmul.bf16.gmra.mxu0 %v623
        %v820 = vpop.f32.mrf.mxu0
        %v821 = vadd.f32 %v521, %v820
        %v822 = vpop.f32.mrf.mxu0
        %v823 = vadd.f32 %v521, %v822
        %824 = vmatmul.bf16.gmra.mxu0 %v625
        %v825 = vpop.f32.mrf.mxu0
        %v826 = vadd.f32 %v521, %v825
        %v827 = vpop.f32.mrf.mxu0
        %v828 = vadd.f32 %v521, %v827
        %829 = vmatmul.bf16.gmra.mxu0 %v627
        %v830 = vpop.f32.mrf.mxu0
        %v831 = vadd.f32 %v521, %v830
        %v832 = vpop.f32.mrf.mxu0
        %v833 = vadd.f32 %v521, %v832
        %834 = vmatmul.bf16.gmra.mxu0 %v629
        %v835 = vpop.f32.mrf.mxu0
        %v836 = vadd.f32 %v521, %v835
        %v837 = vpop.f32.mrf.mxu0
        %v838 = vadd.f32 %v521, %v837
        %839 = vmatmul.bf16.gmra.mxu0 %v631
        %v840 = vpop.f32.mrf.mxu0
        %v841 = vadd.f32 %v521, %v840
        %v842 = vpop.f32.mrf.mxu0
        %v843 = vadd.f32 %v521, %v842
        %844 = vmatmul.bf16.gmra.mxu0 %v633
        %v845 = vpop.f32.mrf.mxu0
        %v846 = vadd.f32 %v521, %v845
        %v847 = vpop.f32.mrf.mxu0
        %v848 = vadd.f32 %v521, %v847
        %849 = vmatmul.bf16.gmra.mxu0 %v635
        %v850 = vpop.f32.mrf.mxu0
        %v851 = vadd.f32 %v521, %v850
        %v852 = vpop.f32.mrf.mxu0
        %v853 = vadd.f32 %v521, %v852
        %854 = vmatmul.bf16.gmra.mxu0 %v637
        %v855 = vpop.f32.mrf.mxu0
        %v856 = vadd.f32 %v521, %v855
        %v857 = vpop.f32.mrf.mxu0
        %v858 = vadd.f32 %v521, %v857
        %859 = vmatmul.bf16.gmra.mxu0 %v639
        %v860 = vpop.f32.mrf.mxu0
        %v861 = vadd.f32 %v521, %v860
        %v862 = vpop.f32.mrf.mxu0
        %v863 = vadd.f32 %v521, %v862
        %864 = vmatmul.bf16.gmra.mxu0 %v641
        %v865 = vpop.f32.mrf.mxu0
        %v866 = vadd.f32 %v521, %v865
        %v867 = vpop.f32.mrf.mxu0
        %v868 = vadd.f32 %v521, %v867
        %869 = vmatmul.bf16.gmra.mxu0 %v643
        %v870 = vpop.f32.mrf.mxu0
        %v871 = vadd.f32 %v521, %v870
        %v872 = vpop.f32.mrf.mxu0
        %v873 = vadd.f32 %v521, %v872
        %874 = vmatmul.bf16.gmra.mxu0 %v645
        %v875 = vpop.f32.mrf.mxu0
        %v876 = vadd.f32 %v521, %v875
        %v877 = vpop.f32.mrf.mxu0
        %v878 = vadd.f32 %v521, %v877
        %879 = vmatmul.bf16.gmra.mxu0 %v647
        %v880 = vpop.f32.mrf.mxu0
        %v881 = vadd.f32 %v521, %v880
        %v882 = vpop.f32.mrf.mxu0
        %v883 = vadd.f32 %v521, %v882
        %884 = vmatmul.bf16.gmra.mxu0 %v649
        %v885 = vpop.f32.mrf.mxu0
        %v886 = vadd.f32 %v521, %v885
        %v887 = vpop.f32.mrf.mxu0
        %v888 = vadd.f32 %v521, %v887
        %889 = vdwg.mxu0
        %890 = vmatpush.bf16.msra.mxu0 0
        %891 = vmatpush.bf16.msra.mxu0 0
        %892 = vmatpush.bf16.msra.mxu0 %v799
        %893 = vmatpush.bf16.msra.mxu0 %v733
        %894 = vmatpush.bf16.msra.mxu0 %v732
        %895 = vmatpush.bf16.msra.mxu0 %v731
        %896 = vmatpush.bf16.msra.mxu0 %v730
        %897 = vmatpush.bf16.msra.mxu0 %v729
        %898 = vmatmul.bf16.gmra.mxu0 %v750
        %v899 = vpop.f32.mrf.mxu0
        %v900 = vadd.f32 %v811, %v899
        %v901 = vpop.f32.mrf.mxu0
        %v902 = vadd.f32 %v813, %v901
        %903 = vmatmul.bf16.gmra.mxu0 %v753
        %v904 = vpop.f32.mrf.mxu0
        %v905 = vadd.f32 %v816, %v904
        %v906 = vpop.f32.mrf.mxu0
        %v907 = vadd.f32 %v818, %v906
        %908 = vmatmul.bf16.gmra.mxu0 %v756
        %v909 = vpop.f32.mrf.mxu0
        %v910 = vadd.f32 %v821, %v909
        %v911 = vpop.f32.mrf.mxu0
        %v912 = vadd.f32 %v823, %v911
        %913 = vmatmul.bf16.gmra.mxu0 %v759
        %v914 = vpop.f32.mrf.mxu0
        %v915 = vadd.f32 %v826, %v914
        %v916 = vpop.f32.mrf.mxu0
        %v917 = vadd.f32 %v828, %v916
        %918 = vmatmul.bf16.gmra.mxu0 %v762
        %v919 = vpop.f32.mrf.mxu0
        %v920 = vadd.f32 %v831, %v919
        %v921 = vpop.f32.mrf.mxu0
        %v922 = vadd.f32 %v833, %v921
        %923 = vmatmul.bf16.gmra.mxu0 %v765
        %v924 = vpop.f32.mrf.mxu0
        %v925 = vadd.f32 %v836, %v924
        %v926 = vpop.f32.mrf.mxu0
        %v927 = vadd.f32 %v838, %v926
        %928 = vmatmul.bf16.gmra.mxu0 %v768
        %v929 = vpop.f32.mrf.mxu0
        %v930 = vadd.f32 %v841, %v929
        %v931 = vpop.f32.mrf.mxu0
        %v932 = vadd.f32 %v843, %v931
        %933 = vmatmul.bf16.gmra.mxu0 %v771
        %v934 = vpop.f32.mrf.mxu0
        %v935 = vadd.f32 %v846, %v934
        %v936 = vpop.f32.mrf.mxu0
        %v937 = vadd.f32 %v848, %v936
        %938 = vmatmul.bf16.gmra.mxu0 %v774
        %v939 = vpop.f32.mrf.mxu0
        %v940 = vadd.f32 %v851, %v939
        %v941 = vpop.f32.mrf.mxu0
        %v942 = vadd.f32 %v853, %v941
        %943 = vmatmul.bf16.gmra.mxu0 %v777
        %v944 = vpop.f32.mrf.mxu0
        %v945 = vadd.f32 %v856, %v944
        %v946 = vpop.f32.mrf.mxu0
        %v947 = vadd.f32 %v858, %v946
        %948 = vmatmul.bf16.gmra.mxu0 %v780
        %v949 = vpop.f32.mrf.mxu0
        %v950 = vadd.f32 %v861, %v949
        %v951 = vpop.f32.mrf.mxu0
        %v952 = vadd.f32 %v863, %v951
        %953 = vmatmul.bf16.gmra.mxu0 %v783
        %v954 = vpop.f32.mrf.mxu0
        %v955 = vadd.f32 %v866, %v954
        %v956 = vpop.f32.mrf.mxu0
        %v957 = vadd.f32 %v868, %v956
        %958 = vmatmul.bf16.gmra.mxu0 %v786
        %v959 = vpop.f32.mrf.mxu0
        %v960 = vadd.f32 %v871, %v959
        %v961 = vpop.f32.mrf.mxu0
        %v962 = vadd.f32 %v873, %v961
        %963 = vmatmul.bf16.gmra.mxu0 %v789
        %v964 = vpop.f32.mrf.mxu0
        %v965 = vadd.f32 %v876, %v964
        %v966 = vpop.f32.mrf.mxu0
        %v967 = vadd.f32 %v878, %v966
        %968 = vmatmul.bf16.gmra.mxu0 %v792
        %v969 = vpop.f32.mrf.mxu0
        %v970 = vadd.f32 %v881, %v969
        %v971 = vpop.f32.mrf.mxu0
        %v972 = vadd.f32 %v883, %v971
        %973 = vmatmul.bf16.gmra.mxu0 %v795
        %v974 = vpop.f32.mrf.mxu0
        %v975 = vadd.f32 %v886, %v974
        %v976 = vpop.f32.mrf.mxu0
        %v977 = vadd.f32 %v888, %v976
        %978 = vdwg.mxu0
        // Predicated region
        $region65: #{tpu_custom_call.1} parent=59 // pred_check
          %p979 = pneg %p451
        $region66: #{tpu_custom_call.1} parent=59 // pred_check_branch
          %981 = sbr.rel (%p979) target = $region68
        $region67: #{tpu_custom_call.1} parent=59 // pred_region
          %v982 = vld [vmem:[#allocation2] sm:$0x1]
          %vm983 = vcmask 785408
          %v984 = vsel %vm983, %v900, 0.0
          %v985 = vsel %vm983, %v902, 0.0
          %v986 = vadd.f32 %v984, %v985
          %v987 = vsel %vm983, %v905, 0.0
          %v988 = vadd.f32 %v986, %v987
          %v989 = vsel %vm983, %v907, 0.0
          %v990 = vadd.f32 %v988, %v989
          %v991 = vsel %vm983, %v910, 0.0
          %v992 = vadd.f32 %v990, %v991
          %v993 = vsel %vm983, %v912, 0.0
          %v994 = vadd.f32 %v992, %v993
          %v995 = vsel %vm983, %v915, 0.0
          %v996 = vadd.f32 %v994, %v995
          %v997 = vsel %vm983, %v917, 0.0
          %v998 = vadd.f32 %v996, %v997
          %v999 = vsel %vm983, %v920, 0.0
          %v1000 = vadd.f32 %v998, %v999
          %v1001 = vsel %vm983, %v922, 0.0
          %v1002 = vadd.f32 %v1000, %v1001
          %v1003 = vsel %vm983, %v925, 0.0
          %v1004 = vadd.f32 %v1002, %v1003
          %v1005 = vsel %vm983, %v927, 0.0
          %v1006 = vadd.f32 %v1004, %v1005
          %v1007 = vsel %vm983, %v930, 0.0
          %v1008 = vadd.f32 %v1006, %v1007
          %v1009 = vsel %vm983, %v932, 0.0
          %v1010 = vadd.f32 %v1008, %v1009
          %v1011 = vsel %vm983, %v935, 0.0
          %v1012 = vadd.f32 %v1010, %v1011
          %v1013 = vsel %vm983, %v937, 0.0
          %v1014 = vadd.f32 %v1012, %v1013
          %v1015 = vsel %vm983, %v940, 0.0
          %v1016 = vadd.f32 %v1014, %v1015
          %v1017 = vsel %vm983, %v942, 0.0
          %v1018 = vadd.f32 %v1016, %v1017
          %v1019 = vsel %vm983, %v945, 0.0
          %v1020 = vadd.f32 %v1018, %v1019
          %v1021 = vsel %vm983, %v947, 0.0
          %v1022 = vadd.f32 %v1020, %v1021
          %v1023 = vsel %vm983, %v950, 0.0
          %v1024 = vadd.f32 %v1022, %v1023
          %v1025 = vsel %vm983, %v952, 0.0
          %v1026 = vadd.f32 %v1024, %v1025
          %v1027 = vsel %vm983, %v955, 0.0
          %v1028 = vadd.f32 %v1026, %v1027
          %v1029 = vsel %vm983, %v957, 0.0
          %v1030 = vadd.f32 %v1028, %v1029
          %v1031 = vsel %vm983, %v960, 0.0
          %v1032 = vadd.f32 %v1030, %v1031
          %v1033 = vsel %vm983, %v962, 0.0
          %v1034 = vadd.f32 %v1032, %v1033
          %v1035 = vsel %vm983, %v965, 0.0
          %v1036 = vadd.f32 %v1034, %v1035
          %v1037 = vsel %vm983, %v967, 0.0
          %v1038 = vadd.f32 %v1036, %v1037
          %v1039 = vsel %vm983, %v970, 0.0
          %v1040 = vadd.f32 %v1038, %v1039
          %v1041 = vsel %vm983, %v972, 0.0
          %v1042 = vadd.f32 %v1040, %v1041
          %v1043 = vsel %vm983, %v975, 0.0
          %v1044 = vadd.f32 %v1042, %v1043
          %v1045 = vsel %vm983, %v977, 0.0
          %v1046 = vadd.f32 %v1044, %v1045
          %v1047 = vrot.slane %v1046, 4
          %v1048 = vadd.f32 %v1046, %v1047
          %v1049 = vrot.slane %v1048, 2
          %v1050 = vadd.f32 %v1048, %v1049
          %v1051 = vrot.slane %v1050, 1
          %v1052 = vadd.f32 %v1050, %v1051
          %v1053 = vadd.f32 %v982, %v1052
          %vm1054 = vcmask 778240
          %1055 = vst.msk [vmem:[#allocation2] sm:$0x1] %vm1054, %v1053
          %v1056 = vld [vmem:[#allocation3] sm:$0x1]
          %v1057 = vmul.f32 %v900, %v900
          %v1058 = vmul.f32 %v902, %v902
          %v1059 = vmul.f32 %v905, %v905
          %v1060 = vmul.f32 %v907, %v907
          %v1061 = vmul.f32 %v910, %v910
          %v1062 = vmul.f32 %v912, %v912
          %v1063 = vmul.f32 %v915, %v915
          %v1064 = vmul.f32 %v917, %v917
          %v1065 = vmul.f32 %v920, %v920
          %v1066 = vmul.f32 %v922, %v922
          %v1067 = vmul.f32 %v925, %v925
          %v1068 = vmul.f32 %v927, %v927
          %v1069 = vmul.f32 %v930, %v930
          %v1070 = vmul.f32 %v932, %v932
          %v1071 = vmul.f32 %v935, %v935
          %v1072 = vmul.f32 %v937, %v937
          %v1073 = vmul.f32 %v940, %v940
          %v1074 = vmul.f32 %v942, %v942
          %v1075 = vmul.f32 %v945, %v945
          %v1076 = vmul.f32 %v947, %v947
          %v1077 = vmul.f32 %v950, %v950
          %v1078 = vmul.f32 %v952, %v952
          %v1079 = vmul.f32 %v955, %v955
          %v1080 = vmul.f32 %v957, %v957
          %v1081 = vmul.f32 %v960, %v960
          %v1082 = vmul.f32 %v962, %v962
          %v1083 = vmul.f32 %v965, %v965
          %v1084 = vmul.f32 %v967, %v967
          %v1085 = vmul.f32 %v970, %v970
          %v1086 = vmul.f32 %v972, %v972
          %v1087 = vmul.f32 %v975, %v975
          %v1088 = vmul.f32 %v977, %v977
          %v1089 = vsel %vm983, %v1057, 0.0
          %v1090 = vsel %vm983, %v1058, 0.0
          %v1091 = vadd.f32 %v1089, %v1090
          %v1092 = vsel %vm983, %v1059, 0.0
          %v1093 = vadd.f32 %v1091, %v1092
          %v1094 = vsel %vm983, %v1060, 0.0
          %v1095 = vadd.f32 %v1093, %v1094
          %v1096 = vsel %vm983, %v1061, 0.0
          %v1097 = vadd.f32 %v1095, %v1096
          %v1098 = vsel %vm983, %v1062, 0.0
          %v1099 = vadd.f32 %v1097, %v1098
          %v1100 = vsel %vm983, %v1063, 0.0
          %v1101 = vadd.f32 %v1099, %v1100
          %v1102 = vsel %vm983, %v1064, 0.0
          %v1103 = vadd.f32 %v1101, %v1102
          %v1104 = vsel %vm983, %v1065, 0.0
          %v1105 = vadd.f32 %v1103, %v1104
          %v1106 = vsel %vm983, %v1066, 0.0
          %v1107 = vadd.f32 %v1105, %v1106
          %v1108 = vsel %vm983, %v1067, 0.0
          %v1109 = vadd.f32 %v1107, %v1108
          %v1110 = vsel %vm983, %v1068, 0.0
          %v1111 = vadd.f32 %v1109, %v1110
          %v1112 = vsel %vm983, %v1069, 0.0
          %v1113 = vadd.f32 %v1111, %v1112
          %v1114 = vsel %vm983, %v1070, 0.0
          %v1115 = vadd.f32 %v1113, %v1114
          %v1116 = vsel %vm983, %v1071, 0.0
          %v1117 = vadd.f32 %v1115, %v1116
          %v1118 = vsel %vm983, %v1072, 0.0
          %v1119 = vadd.f32 %v1117, %v1118
          %v1120 = vsel %vm983, %v1073, 0.0
          %v1121 = vadd.f32 %v1119, %v1120
          %v1122 = vsel %vm983, %v1074, 0.0
          %v1123 = vadd.f32 %v1121, %v1122
          %v1124 = vsel %vm983, %v1075, 0.0
          %v1125 = vadd.f32 %v1123, %v1124
          %v1126 = vsel %vm983, %v1076, 0.0
          %v1127 = vadd.f32 %v1125, %v1126
          %v1128 = vsel %vm983, %v1077, 0.0
          %v1129 = vadd.f32 %v1127, %v1128
          %v1130 = vsel %vm983, %v1078, 0.0
          %v1131 = vadd.f32 %v1129, %v1130
          %v1132 = vsel %vm983, %v1079, 0.0
          %v1133 = vadd.f32 %v1131, %v1132
          %v1134 = vsel %vm983, %v1080, 0.0
          %v1135 = vadd.f32 %v1133, %v1134
          %v1136 = vsel %vm983, %v1081, 0.0
          %v1137 = vadd.f32 %v1135, %v1136
          %v1138 = vsel %vm983, %v1082, 0.0
          %v1139 = vadd.f32 %v1137, %v1138
          %v1140 = vsel %vm983, %v1083, 0.0
          %v1141 = vadd.f32 %v1139, %v1140
          %v1142 = vsel %vm983, %v1084, 0.0
          %v1143 = vadd.f32 %v1141, %v1142
          %v1144 = vsel %vm983, %v1085, 0.0
          %v1145 = vadd.f32 %v1143, %v1144
          %v1146 = vsel %vm983, %v1086, 0.0
          %v1147 = vadd.f32 %v1145, %v1146
          %v1148 = vsel %vm983, %v1087, 0.0
          %v1149 = vadd.f32 %v1147, %v1148
          %v1150 = vsel %vm983, %v1088, 0.0
          %v1151 = vadd.f32 %v1149, %v1150
          %v1152 = vrot.slane %v1151, 4
          %v1153 = vadd.f32 %v1151, %v1152
          %v1154 = vrot.slane %v1153, 2
          %v1155 = vadd.f32 %v1153, %v1154
          %v1156 = vrot.slane %v1155, 1
          %v1157 = vadd.f32 %v1155, %v1156
          %v1158 = vadd.f32 %v1056, %v1157
          %1159 = vst.msk [vmem:[#allocation3] sm:$0x1] %vm1054, %v1158
        $region68: #{tpu_custom_call.1} parent=59 // pred_fallthru
          _
        %p1160 = scmp.eq.s32.totalorder %s32, 1
        // Predicated region
        $region69: #{tpu_custom_call.1} parent=59 // pred_check
          %p1161 = pneg %p1160
        $region70: #{tpu_custom_call.1} parent=59 // pred_check_branch
          %1163 = sbr.rel (%p1161) target = $region72
        $region71: #{tpu_custom_call.1} parent=59 // pred_region
          %v1164 = vld [vmem:[#allocation2] sm:$0x1]
          %v1165 = vld [vmem:[%s3] sm:$0xff]
          %v1166 = vld [vmem:[%s3 + $0x8] sm:$0xff]
          %v1167 = vld [vmem:[%s3 + $0x10] sm:$0xff]
          %v1168 = vld [vmem:[%s3 + $0x18] sm:$0xff]
          %v1169 = vld [vmem:[%s3 + $0x20] sm:$0xff]
          %v1170 = vld [vmem:[%s3 + $0x28] sm:$0xff]
          %v1171 = vld [vmem:[%s3 + $0x30] sm:$0xff]
          %v1172 = vld [vmem:[%s3 + $0x38] sm:$0xff]
          %v1173 = vld [vmem:[%s3 + $0x40] sm:$0xff]
          %v1174 = vld [vmem:[%s3 + $0x48] sm:$0xff]
          %v1175 = vld [vmem:[%s3 + $0x50] sm:$0xff]
          %v1176 = vld [vmem:[%s3 + $0x58] sm:$0xff]
          %vm1177 = vcmask 785408
          %v1179 = vsel %vm1177, %v1164, 0
          %1181 = vmatpush.msra.mxu0 0.0
          %1182 = vmatpush.msra.mxu0 0.0
          %1183 = vmatpush.msra.mxu0 0.0
          %1184 = vmatpush.msra.mxu0 0.0
          %1185 = vmatpush.msra.mxu0 %v1176
          %1186 = vmatpush.msra.mxu0 %v1175
          %1187 = vmatpush.msra.mxu0 %v1174
          %1188 = vmatpush.msra.mxu0 %v1173
          %1189 = vmatpush.msra.mxu0 %v1172
          %1190 = vmatpush.msra.mxu0 %v1171
          %1191 = vmatpush.msra.mxu0 %v1170
          %1192 = vmatpush.msra.mxu0 %v1169
          %1193 = vmatpush.msra.mxu0 %v1168
          %1194 = vmatpush.msra.mxu0 %v1167
          %1195 = vmatpush.msra.mxu0 %v1166
          %1196 = vmatpush.msra.mxu0 %v1165
          %1197 = vmatmul.f32.gmra.mxu0 %v1179
          %v1198 = vpop.f32.mrf.mxu0
          %v1199 = vadd.f32 0.0, %v1198
          %1200 = vdwg.mxu0
          %v1201 = vld [vmem:[#allocation3] sm:$0x1]
          %v1203 = vsel %vm1177, %v1201, 0
          %1205 = vmatpush.msra.mxu0 0.0
          %1206 = vmatpush.msra.mxu0 0.0
          %1207 = vmatpush.msra.mxu0 0.0
          %1208 = vmatpush.msra.mxu0 0.0
          %1209 = vmatpush.msra.mxu0 %v1176
          %1210 = vmatpush.msra.mxu0 %v1175
          %1211 = vmatpush.msra.mxu0 %v1174
          %1212 = vmatpush.msra.mxu0 %v1173
          %1213 = vmatpush.msra.mxu0 %v1172
          %1214 = vmatpush.msra.mxu0 %v1171
          %1215 = vmatpush.msra.mxu0 %v1170
          %1216 = vmatpush.msra.mxu0 %v1169
          %1217 = vmatpush.msra.mxu0 %v1168
          %1218 = vmatpush.msra.mxu0 %v1167
          %1219 = vmatpush.msra.mxu0 %v1166
          %1220 = vmatpush.msra.mxu0 %v1165
          %1221 = vmatmul.f32.gmra.mxu0 %v1203
          %v1222 = vpop.f32.mrf.mxu0
          %v1223 = vadd.f32 0.0, %v1222
          %1224 = vdwg.mxu0
          %v1225 = vmul.f32 %v1199, 0.0013020834
          %v1226 = vmul.f32 %v1223, 0.0013020834
          %v1227 = vmul.f32 %v1225, %v1225
          %v1228 = vsub.f32 %v1226, %v1227
          %v1229 = vadd.f32 %v1228, 1e-05
          %v1230 = vrsqrt.pop %v1229
          %v1231 = vmul.f32 %v1230, %v1229
          %v1232 = vmul.f32 %v1231, %v1230
          %v1233 = vmul.f32 0.5, %v1232
          %v1234 = vsub.f32 1.5, %v1233
          %v1235 = vmul.f32 %v1230, %v1234
          %vm1236 = vweird.f32 %v1229
          %vm1237 = vweird.f32 %v1230
          %vm1238 = vmor %vm1236, %vm1237
          %v1239 = vsel %vm1238, %v1230, %v1235
          %v1240 = vld [vmem:[%s4] sm:$0x1]
          %v1241 = vmul.f32 %v1239, %v1240
          %v1242 = vld [vmem:[%s5] sm:$0x1]
          %v1243 = vmul.f32 %v1225, %v1241
          %v1244 = vsub.f32 %v1242, %v1243
          %v1245 = vperm.slane %v1241, 0
          %v1246 = vmul.f32 %v900, %v1245
          %v1247 = vmul.f32 %v902, %v1245
          %v1248 = vmul.f32 %v905, %v1245
          %v1249 = vmul.f32 %v907, %v1245
          %v1250 = vmul.f32 %v910, %v1245
          %v1251 = vmul.f32 %v912, %v1245
          %v1252 = vmul.f32 %v915, %v1245
          %v1253 = vmul.f32 %v917, %v1245
          %v1254 = vmul.f32 %v920, %v1245
          %v1255 = vmul.f32 %v922, %v1245
          %v1256 = vmul.f32 %v925, %v1245
          %v1257 = vmul.f32 %v927, %v1245
          %v1258 = vmul.f32 %v930, %v1245
          %v1259 = vmul.f32 %v932, %v1245
          %v1260 = vmul.f32 %v935, %v1245
          %v1261 = vmul.f32 %v937, %v1245
          %v1262 = vmul.f32 %v940, %v1245
          %v1263 = vmul.f32 %v942, %v1245
          %v1264 = vmul.f32 %v945, %v1245
          %v1265 = vmul.f32 %v947, %v1245
          %v1266 = vmul.f32 %v950, %v1245
          %v1267 = vmul.f32 %v952, %v1245
          %v1268 = vmul.f32 %v955, %v1245
          %v1269 = vmul.f32 %v957, %v1245
          %v1270 = vmul.f32 %v960, %v1245
          %v1271 = vmul.f32 %v962, %v1245
          %v1272 = vmul.f32 %v965, %v1245
          %v1273 = vmul.f32 %v967, %v1245
          %v1274 = vmul.f32 %v970, %v1245
          %v1275 = vmul.f32 %v972, %v1245
          %v1276 = vmul.f32 %v975, %v1245
          %v1277 = vmul.f32 %v977, %v1245
          %v1279 = vperm.slane %v1244, 0
          %v1281 = vadd.f32 %v1246, %v1279
          %v1282 = vadd.f32 %v1247, %v1279
          %v1283 = vadd.f32 %v1248, %v1279
          %v1284 = vadd.f32 %v1249, %v1279
          %v1285 = vadd.f32 %v1250, %v1279
          %v1286 = vadd.f32 %v1251, %v1279
          %v1287 = vadd.f32 %v1252, %v1279
          %v1288 = vadd.f32 %v1253, %v1279
          %v1289 = vadd.f32 %v1254, %v1279
          %v1290 = vadd.f32 %v1255, %v1279
          %v1291 = vadd.f32 %v1256, %v1279
          %v1292 = vadd.f32 %v1257, %v1279
          %v1293 = vadd.f32 %v1258, %v1279
          %v1294 = vadd.f32 %v1259, %v1279
          %v1295 = vadd.f32 %v1260, %v1279
          %v1296 = vadd.f32 %v1261, %v1279
          %v1297 = vadd.f32 %v1262, %v1279
          %v1298 = vadd.f32 %v1263, %v1279
          %v1299 = vadd.f32 %v1264, %v1279
          %v1300 = vadd.f32 %v1265, %v1279
          %v1301 = vadd.f32 %v1266, %v1279
          %v1302 = vadd.f32 %v1267, %v1279
          %v1303 = vadd.f32 %v1268, %v1279
          %v1304 = vadd.f32 %v1269, %v1279
          %v1305 = vadd.f32 %v1270, %v1279
          %v1306 = vadd.f32 %v1271, %v1279
          %v1307 = vadd.f32 %v1272, %v1279
          %v1308 = vadd.f32 %v1273, %v1279
          %v1309 = vadd.f32 %v1274, %v1279
          %v1310 = vadd.f32 %v1275, %v1279
          %v1311 = vadd.f32 %v1276, %v1279
          %v1312 = vadd.f32 %v1277, %v1279
          %v1313 = vmax.f32 %v1281, 0.0
          %v1314 = vmax.f32 %v1282, 0.0
          %v1315 = vmax.f32 %v1283, 0.0
          %v1316 = vmax.f32 %v1284, 0.0
          %v1317 = vmax.f32 %v1285, 0.0
          %v1318 = vmax.f32 %v1286, 0.0
          %v1319 = vmax.f32 %v1287, 0.0
          %v1320 = vmax.f32 %v1288, 0.0
          %v1321 = vmax.f32 %v1289, 0.0
          %v1322 = vmax.f32 %v1290, 0.0
          %v1323 = vmax.f32 %v1291, 0.0
          %v1324 = vmax.f32 %v1292, 0.0
          %v1325 = vmax.f32 %v1293, 0.0
          %v1326 = vmax.f32 %v1294, 0.0
          %v1327 = vmax.f32 %v1295, 0.0
          %v1328 = vmax.f32 %v1296, 0.0
          %v1329 = vmax.f32 %v1297, 0.0
          %v1330 = vmax.f32 %v1298, 0.0
          %v1331 = vmax.f32 %v1299, 0.0
          %v1332 = vmax.f32 %v1300, 0.0
          %v1333 = vmax.f32 %v1301, 0.0
          %v1334 = vmax.f32 %v1302, 0.0
          %v1335 = vmax.f32 %v1303, 0.0
          %v1336 = vmax.f32 %v1304, 0.0
          %v1337 = vmax.f32 %v1305, 0.0
          %v1338 = vmax.f32 %v1306, 0.0
          %v1339 = vmax.f32 %v1307, 0.0
          %v1340 = vmax.f32 %v1308, 0.0
          %v1341 = vmax.f32 %v1309, 0.0
          %v1342 = vmax.f32 %v1310, 0.0
          %v1343 = vmax.f32 %v1311, 0.0
          %v1344 = vmax.f32 %v1312, 0.0
          %v1345 = vld [vmem:[%s6] sm:$0x7]
          %v1346 = vld [vmem:[%s7] sm:$0x7]
          %1348 = vset.pattern.permute.xlu0 0
          %1349 = vperm.xlu0 %1348, %v1346
          %v1350 = vpop.permute.xlu0 %1349
          %v1353 = vsel %vm1177, %v1345, 0
          %v1356 = vsel %vm1177, %v1313, 0
          %v1359 = vsel %vm1177, %v1314, 0
          %v1362 = vsel %vm1177, %v1315, 0
          %v1365 = vsel %vm1177, %v1316, 0
          %v1368 = vsel %vm1177, %v1317, 0
          %v1371 = vsel %vm1177, %v1318, 0
          %v1374 = vsel %vm1177, %v1319, 0
          %v1377 = vsel %vm1177, %v1320, 0
          %v1380 = vsel %vm1177, %v1321, 0
          %v1383 = vsel %vm1177, %v1322, 0
          %v1386 = vsel %vm1177, %v1323, 0
          %v1389 = vsel %vm1177, %v1324, 0
          %v1392 = vsel %vm1177, %v1325, 0
          %v1395 = vsel %vm1177, %v1326, 0
          %v1398 = vsel %vm1177, %v1327, 0
          %v1401 = vsel %vm1177, %v1328, 0
          %v1404 = vsel %vm1177, %v1329, 0
          %v1407 = vsel %vm1177, %v1330, 0
          %v1410 = vsel %vm1177, %v1331, 0
          %v1413 = vsel %vm1177, %v1332, 0
          %v1416 = vsel %vm1177, %v1333, 0
          %v1419 = vsel %vm1177, %v1334, 0
          %v1422 = vsel %vm1177, %v1335, 0
          %v1425 = vsel %vm1177, %v1336, 0
          %v1428 = vsel %vm1177, %v1337, 0
          %v1431 = vsel %vm1177, %v1338, 0
          %v1434 = vsel %vm1177, %v1339, 0
          %v1437 = vsel %vm1177, %v1340, 0
          %v1440 = vsel %vm1177, %v1341, 0
          %v1443 = vsel %vm1177, %v1342, 0
          %v1446 = vsel %vm1177, %v1343, 0
          %v1449 = vsel %vm1177, %v1344, 0
          %1451 = vmatpush.xpose.msra.mxu0 %v1401
          %1452 = vmatpush.xpose.msra.mxu0 %v1398
          %1453 = vmatpush.xpose.msra.mxu0 %v1395
          %1454 = vmatpush.xpose.msra.mxu0 %v1392
          %1455 = vmatpush.xpose.msra.mxu0 %v1389
          %1456 = vmatpush.xpose.msra.mxu0 %v1386
          %1457 = vmatpush.xpose.msra.mxu0 %v1383
          %1458 = vmatpush.xpose.msra.mxu0 %v1380
          %1459 = vmatpush.xpose.msra.mxu0 %v1377
          %1460 = vmatpush.xpose.msra.mxu0 %v1374
          %1461 = vmatpush.xpose.msra.mxu0 %v1371
          %1462 = vmatpush.xpose.msra.mxu0 %v1368
          %1463 = vmatpush.xpose.msra.mxu0 %v1365
          %1464 = vmatpush.xpose.msra.mxu0 %v1362
          %1465 = vmatpush.xpose.msra.mxu0 %v1359
          %1466 = vmatpush.xpose.msra.mxu0 %v1356
          %1467 = vmatmul.f32.gmra.mxu0 %v1353
          %v1468 = vpop.f32.mrf.mxu0
          %v1469 = vadd.f32 %v1350, %v1468
          %1470 = vdwg.mxu0
          %1471 = vmatpush.xpose.msra.mxu0 %v1449
          %1472 = vmatpush.xpose.msra.mxu0 %v1446
          %1473 = vmatpush.xpose.msra.mxu0 %v1443
          %1474 = vmatpush.xpose.msra.mxu0 %v1440
          %1475 = vmatpush.xpose.msra.mxu0 %v1437
          %1476 = vmatpush.xpose.msra.mxu0 %v1434
          %1477 = vmatpush.xpose.msra.mxu0 %v1431
          %1478 = vmatpush.xpose.msra.mxu0 %v1428
          %1479 = vmatpush.xpose.msra.mxu0 %v1425
          %1480 = vmatpush.xpose.msra.mxu0 %v1422
          %1481 = vmatpush.xpose.msra.mxu0 %v1419
          %1482 = vmatpush.xpose.msra.mxu0 %v1416
          %1483 = vmatpush.xpose.msra.mxu0 %v1413
          %1484 = vmatpush.xpose.msra.mxu0 %v1410
          %1485 = vmatpush.xpose.msra.mxu0 %v1407
          %1486 = vmatpush.xpose.msra.mxu0 %v1404
          %1487 = vmatmul.f32.gmra.mxu0 %v1353
          %v1488 = vpop.f32.mrf.mxu0
          %v1489 = vadd.f32 %v1350, %v1488
          %1490 = vdwg.mxu0
          %v1491 = vxor.u32 %v1469, 2147483648
          %v1492 = vxor.u32 %v1489, 2147483648
          %v1493 = vmul.f32 %v1491, 1.442695
          %v1494 = vpow.pop %v1493
          %v1495 = vmul.f32 %v1492, 1.442695
          %v1496 = vpow.pop %v1495
          %v1497 = vadd.f32 %v1494, 1.0
          %v1498 = vadd.f32 %v1496, 1.0
          %v1499 = vrcp.pop %v1497
          %v1500 = vmul.f32 %v1497, %v1499
          %v1501 = vsub.f32 1.0, %v1500
          %v1502 = vmul.f32 %v1499, %v1501
          %v1503 = vadd.f32 %v1499, %v1502
          %vm1504 = vweird.f32 %v1497
          %vm1505 = vweird.f32 %v1499
          %vm1506 = vmor %vm1504, %vm1505
          %v1507 = vsel %vm1506, %v1499, %v1503
          %v1508 = vand.u32 2147483647, %v1497
          %vm1509 = vcmp.eq.f32.partialorder %v1508, 8.507059e+37
          %v1510 = vand.u32 %v1497, 2147483648
          %v1511 = vor.u32 1.1754944e-38, %v1510
          %v1512 = vsel %vm1509, %v1511, %v1507
          %v1513 = vmul.f32 1.0, %v1512
          %v1514 = vrcp.pop %v1498
          %v1515 = vmul.f32 %v1498, %v1514
          %v1516 = vsub.f32 1.0, %v1515
          %v1517 = vmul.f32 %v1514, %v1516
          %v1518 = vadd.f32 %v1514, %v1517
          %vm1519 = vweird.f32 %v1498
          %vm1520 = vweird.f32 %v1514
          %vm1521 = vmor %vm1519, %vm1520
          %v1522 = vsel %vm1521, %v1514, %v1518
          %v1523 = vand.u32 2147483647, %v1498
          %vm1524 = vcmp.eq.f32.partialorder %v1523, 8.507059e+37
          %v1525 = vand.u32 %v1498, 2147483648
          %v1526 = vor.u32 1.1754944e-38, %v1525
          %v1527 = vsel %vm1524, %v1526, %v1522
          %v1528 = vmul.f32 1.0, %v1527
          %v1529 = vmax.f32 %v1513, 0.0001
          %v1530 = vmax.f32 %v1528, 0.0001
          %v1531 = vmin.f32 %v1529, 0.9999
          %v1532 = vmin.f32 %v1530, 0.9999
          %v1535 = vrot.slane %v1532, 4
          %v1536 = vsel %vm797, %v1531, %v1535
          %1538 = vst [vmem:[%s447] sm:$0x77] %v1536
          %v1539 = vld [vmem:[%s8] sm:$0xff]
          %v1540 = vld [vmem:[%s9] sm:$0xff]
          %1542 = vset.pattern.permute.xlu0 0
          %1543 = vperm.xlu0 %1542, %v1540
          %v1544 = vpop.permute.xlu0 %1543
          %v1547 = vsel %vm1177, %v1539, 0
          %1549 = vmatpush.xpose.msra.mxu0 %v1401
          %1550 = vmatpush.xpose.msra.mxu0 %v1398
          %1551 = vmatpush.xpose.msra.mxu0 %v1395
          %1552 = vmatpush.xpose.msra.mxu0 %v1392
          %1553 = vmatpush.xpose.msra.mxu0 %v1389
          %1554 = vmatpush.xpose.msra.mxu0 %v1386
          %1555 = vmatpush.xpose.msra.mxu0 %v1383
          %1556 = vmatpush.xpose.msra.mxu0 %v1380
          %1557 = vmatpush.xpose.msra.mxu0 %v1377
          %1558 = vmatpush.xpose.msra.mxu0 %v1374
          %1559 = vmatpush.xpose.msra.mxu0 %v1371
          %1560 = vmatpush.xpose.msra.mxu0 %v1368
          %1561 = vmatpush.xpose.msra.mxu0 %v1365
          %1562 = vmatpush.xpose.msra.mxu0 %v1362
          %1563 = vmatpush.xpose.msra.mxu0 %v1359
          %1564 = vmatpush.xpose.msra.mxu0 %v1356
          %1565 = vmatmul.f32.gmra.mxu0 %v1547
          %v1566 = vpop.f32.mrf.mxu0
          %v1567 = vadd.f32 %v1544, %v1566
          %1568 = vdwg.mxu0
          %1569 = vmatpush.xpose.msra.mxu0 %v1449
          %1570 = vmatpush.xpose.msra.mxu0 %v1446
          %1571 = vmatpush.xpose.msra.mxu0 %v1443
          %1572 = vmatpush.xpose.msra.mxu0 %v1440
          %1573 = vmatpush.xpose.msra.mxu0 %v1437
          %1574 = vmatpush.xpose.msra.mxu0 %v1434
          %1575 = vmatpush.xpose.msra.mxu0 %v1431
          %1576 = vmatpush.xpose.msra.mxu0 %v1428
          %1577 = vmatpush.xpose.msra.mxu0 %v1425
          %1578 = vmatpush.xpose.msra.mxu0 %v1422
          %1579 = vmatpush.xpose.msra.mxu0 %v1419
          %1580 = vmatpush.xpose.msra.mxu0 %v1416
          %1581 = vmatpush.xpose.msra.mxu0 %v1413
          %1582 = vmatpush.xpose.msra.mxu0 %v1410
          %1583 = vmatpush.xpose.msra.mxu0 %v1407
          %1584 = vmatpush.xpose.msra.mxu0 %v1404
          %1585 = vmatmul.f32.gmra.mxu0 %v1547
          %v1586 = vpop.f32.mrf.mxu0
          %v1587 = vadd.f32 %v1544, %v1586
          %1588 = vdwg.mxu0
          %v1589 = vlaneseq
          %v1590 = vshrl.u32 %v1589, 7
          %v1591 = vtanh.pop %v1567
          %v1592 = vtanh.pop %v1587
          %v1593 = vxor.u32 %v1567, 2147483648
          %v1594 = vxor.u32 %v1587, 2147483648
          %v1595 = vmul.f32 %v1593, 1.442695
          %v1596 = vpow.pop %v1595
          %v1597 = vmul.f32 %v1594, 1.442695
          %v1598 = vpow.pop %v1597
          %v1599 = vadd.f32 %v1596, 1.0
          %v1600 = vadd.f32 %v1598, 1.0
          %v1601 = vrcp.pop %v1599
          %v1602 = vmul.f32 %v1599, %v1601
          %v1603 = vsub.f32 1.0, %v1602
          %v1604 = vmul.f32 %v1601, %v1603
          %v1605 = vadd.f32 %v1601, %v1604
          %vm1606 = vweird.f32 %v1599
          %vm1607 = vweird.f32 %v1601
          %vm1608 = vmor %vm1606, %vm1607
          %v1609 = vsel %vm1608, %v1601, %v1605
          %v1610 = vand.u32 2147483647, %v1599
          %vm1611 = vcmp.eq.f32.partialorder %v1610, 8.507059e+37
          %v1612 = vand.u32 %v1599, 2147483648
          %v1613 = vor.u32 1.1754944e-38, %v1612
          %v1614 = vsel %vm1611, %v1613, %v1609
          %v1615 = vmul.f32 1.0, %v1614
          %v1616 = vrcp.pop %v1600
          %v1617 = vmul.f32 %v1600, %v1616
          %v1618 = vsub.f32 1.0, %v1617
          %v1619 = vmul.f32 %v1616, %v1618
          %v1620 = vadd.f32 %v1616, %v1619
          %vm1621 = vweird.f32 %v1600
          %vm1622 = vweird.f32 %v1616
          %vm1623 = vmor %vm1621, %vm1622
          %v1624 = vsel %vm1623, %v1616, %v1620
          %v1625 = vand.u32 2147483647, %v1600
          %vm1626 = vcmp.eq.f32.partialorder %v1625, 8.507059e+37
          %v1627 = vand.u32 %v1600, 2147483648
          %v1628 = vor.u32 1.1754944e-38, %v1627
          %v1629 = vsel %vm1626, %v1628, %v1624
          %v1630 = vmul.f32 1.0, %v1629
          %v1631 = vsub.f32 %v1615, 0.5
          %v1632 = vsub.f32 %v1630, 0.5
          %vm1633 = vcmp.ge.s32.totalorder %v1590, 6
          %v1634 = vmul.f32 %v1567, %v1567
          %v1635 = vmul.f32 %v1587, %v1587
          %v1636 = vsel %vm1633, %v1634, 0.0
          %v1637 = vsel %vm1633, %v1635, 0.0
          %v1638 = vrot.slane %v1636, 4
          %v1639 = vadd.f32 %v1636, %v1638
          %v1640 = vrot.slane %v1639, 2
          %v1641 = vadd.f32 %v1639, %v1640
          %v1642 = vrot.slane %v1641, 1
          %v1643 = vadd.f32 %v1641, %v1642
          %v1644 = vrot.slane %v1637, 4
          %v1645 = vadd.f32 %v1637, %v1644
          %v1646 = vrot.slane %v1645, 2
          %v1647 = vadd.f32 %v1645, %v1646
          %v1648 = vrot.slane %v1647, 1
          %v1649 = vadd.f32 %v1647, %v1648
          %v1650 = vmax.f32 %v1643, 1e-24
          %v1651 = vmax.f32 %v1649, 1e-24
          %v1652 = vrsqrt.pop %v1650
          %v1653 = vmul.f32 %v1652, %v1650
          %v1654 = vmul.f32 %v1653, %v1652
          %v1655 = vmul.f32 0.5, %v1654
          %v1656 = vsub.f32 1.5, %v1655
          %v1657 = vmul.f32 %v1652, %v1656
          %vm1658 = vweird.f32 %v1650
          %vm1659 = vweird.f32 %v1652
          %vm1660 = vmor %vm1658, %vm1659
          %v1661 = vsel %vm1660, %v1652, %v1657
          %v1662 = vrsqrt.pop %v1651
          %v1663 = vmul.f32 %v1662, %v1651
          %v1664 = vmul.f32 %v1663, %v1662
          %v1665 = vmul.f32 0.5, %v1664
          %v1666 = vsub.f32 1.5, %v1665
          %v1667 = vmul.f32 %v1662, %v1666
          %vm1668 = vweird.f32 %v1651
          %vm1669 = vweird.f32 %v1662
          %vm1670 = vmor %vm1668, %vm1669
          %v1671 = vsel %vm1670, %v1662, %v1667
          %v1672 = vmul.f32 %v1567, %v1661
          %v1673 = vmul.f32 %v1587, %v1671
          %vm1674 = vcmp.lt.s32.totalorder %v1590, 3
          %vm1675 = vcmp.lt.s32.totalorder %v1590, 6
          %v1676 = vsel %vm1675, %v1631, %v1672
          %v1677 = vsel %vm1675, %v1632, %v1673
          %v1678 = vsel %vm1674, %v1591, %v1676
          %v1679 = vsel %vm1674, %v1592, %v1677
          %1680 = vst [vmem:[%s427] sm:$0xff] %v1678
          %1681 = vst [vmem:[%s427 + $0x8] sm:$0xff] %v1679
        $region72: #{tpu_custom_call.1} parent=59 // pred_fallthru
          _
        %s1682 = smul.u32 2, %s33
        %p1683 = scmp.lt.s32.totalorder %s31, 1
        %s1684 = scalar_select %p1683, %s31, 1
        %p1685 = scmp.lt.s32.totalorder %s1682, 1
        %s1686 = scalar_select %p1685, %s1682, 1
        %s1687 = smul.addr %s1684, 2
        %s1688 = sadd.s32 %s1686, %s1687
        %s1689 = smul.addr %s1688, 4
        %s1690 = scalar_lea.vmem %s10, %s1689
        %s1691 = sand.u32 %s300, 1
        %s1692 = scalar_lea.sflag [#allocation5], %s1691
        %s1693 = sand.u32 %s300, 1
        %s1694 = smul.addr %s1693, 16
        %s1695 = scalar_lea.vmem [#allocation4], %s1694
        // Predicated region
        $region73: #{tpu_custom_call.1} parent=59 // pred_check
          %p1696 = pneg %p282
        $region74: #{tpu_custom_call.1} parent=59 // pred_check_branch
          %1698 = sbr.rel (%p1696) target = $region76
        $region75: #{tpu_custom_call.1} parent=59 // pred_region
          %s1699 = smul.u32 2, %s33
        $region76: #{tpu_custom_call.1} parent=59 // pred_fallthru
          _
        // Predicated region
        $region77: #{tpu_custom_call.1} parent=59 // pred_check
          %p1700 = pneg %p310
        $region78: #{tpu_custom_call.1} parent=59 // pred_check_branch
          %1702 = sbr.rel (%p1700) target = $region80
        $region79: #{tpu_custom_call.1} parent=59 // pred_region
          %s1703 = smul.u32 2, %s33
          %1705 = vsyncadd %s1692, 0
          %s1706 = smul.addr %s31, 2
          %s1707 = sadd.s32 %s1703, %s1706
          %s1708 = smul.addr %s1707, 8
          %s1709 = scalar_lea.hbm %s11, %s1708
          %s1711 = sshll.u32 %s1695, 4
          %s1712 = int_to_ptr.vmem [resolvable:$true] %s1711
          %s1713 = sshll.u32 %s1709, 4
          %s1714 = int_to_ptr.hbm [resolvable:$true] %s1713
          %1716 = dma.vmem_to_hbm [thread:$0]  %s1712, 256, %s1714, %s1692
        $region80: #{tpu_custom_call.1} parent=59 // pred_fallthru
          _
      $region60: #{tpu_custom_call.1} parent=5 // pred_fallthru
        _
      %p1717 = scmp.le.s32.totalorder 2, %s21
      // Predicated region
      $region81: #{tpu_custom_call.1} parent=5 // pred_check
        %p1718 = pneg %p1717
      $region82: #{tpu_custom_call.1} parent=5 // pred_check_branch
        %1720 = sbr.rel (%p1718) target = $region84
      $region83: #{tpu_custom_call.1} parent=5 // pred_region
        %s1721 = ssub.s32 %s21, 2
        // Predicated region
        $region85: #{tpu_custom_call.1} parent=83 // pred_check
          %p1722 = pneg %p288
        $region86: #{tpu_custom_call.1} parent=83 // pred_check_branch
          %1724 = sbr.rel (%p1722) target = $region88
        $region87: #{tpu_custom_call.1} parent=83 // pred_region
          %s1725 = smul.u32 2, %s36
          %p1726 = scmp.lt.s32.totalorder %s34, 1
          %s1727 = scalar_select %p1726, %s34, 1
          %p1728 = scmp.lt.s32.totalorder %s1725, 1
          %s1729 = scalar_select %p1728, %s1725, 1
          %s1730 = smul.addr %s1727, 2
          %s1731 = sadd.s32 %s1729, %s1730
          %s1732 = smul.addr %s1731, 4
          %s1733 = scalar_lea.vmem %s10, %s1732
        $region88: #{tpu_custom_call.1} parent=83 // pred_fallthru
          _
        // Predicated region
        $region89: #{tpu_custom_call.1} parent=83 // pred_check
          %p1734 = pneg %p316
        $region90: #{tpu_custom_call.1} parent=83 // pred_check_branch
          %1736 = sbr.rel (%p1734) target = $region92
        $region91: #{tpu_custom_call.1} parent=83 // pred_region
          %s1737 = sand.u32 %s301, 1
          %s1738 = scalar_lea.sflag [#allocation5], %s1737
          %s1739 = sand.u32 %s301, 1
          %s1740 = smul.addr %s1739, 16
          %s1741 = scalar_lea.vmem [#allocation4], %s1740
          %1743 = dma.done %s1738, 256
        $region92: #{tpu_custom_call.1} parent=83 // pred_fallthru
          _
      $region84: #{tpu_custom_call.1} parent=5 // pred_fallthru
        _
    $region6: #{tpu_custom_call.1} parent=1 // loop_footer
      %s25 = sadd.s32 1, %s21
    $region7: #{tpu_custom_call.1} parent=1 // loop_footer_branch
      %20 = sbr.rel target = $region3
    $region8: #{tpu_custom_call.1} parent=1 // loop_exit
      _
    %1744 = vsyncpa [#allocation5], 1
    %s1745 = scalar_lea.sflag [#allocation5], 1
    %1746 = vsyncpa %s1745, 1

</llo_original>
